<compile_context>
chip_gen: v7x
topology: tpu7x:2x2x1
jax: 0.10.0
libtpu: 0.0.40
codegen_flags: <defaults>
</compile_context>

<pallas_src>
import jax
import jax.numpy as jnp
from jax.experimental import pallas as pl
from jax.experimental.pallas import tpu as pltpu  # noqa: F401  (TPU backend)

BN_EPS = 1e-3          # nn.BatchNorm1d(eps=0.001)
PD_EPS = 1e-6          # F.pairwise_distance default eps (added to the diff)
TAG_DIM = 300
TAG_DIM_PAD = 384      # 3 * 128 lanes


# ---------------------------------------------------------------------------
# Fused kernel: image fc + two text-net branches + distance / margin count
# ---------------------------------------------------------------------------
def make_fused_forward_kernel(margin):
    margin = float(margin)

    def fused_forward_kernel(
        img_ref, tp_ref, tn_ref,              # activations
        wi_ref, bi_ref,                        # image fc
        w1_ref, g1_ref, be1_ref,               # text fc1 + BN1
        w2_ref, g2_ref, be2_ref,               # text fc2 + BN2
        ie_ref, tpe_ref, tne_ref, corr_ref,    # outputs
    ):
        def bn_relu(y, g, beta):
            # Train-mode BN over the branch's own batch, biased variance.
            # gamma folded into the rsqrt scale; one-pass variance.
            mean = jnp.mean(y, axis=0, keepdims=True)
            var = jnp.mean(y * y, axis=0, keepdims=True) - mean * mean
            scale = g * jax.lax.rsqrt(var + BN_EPS)        # EUP rsqrt
            return jnp.maximum((y - mean) * scale + beta, 0.0)

        def text_branch(tag):
            # fc1 (384->512) -> BN -> ReLU -> fc2 (512->E) -> BN -> ReLU
            y1 = jnp.dot(tag, w1_ref[...], preferred_element_type=jnp.float32)
            h = bn_relu(y1, g1_ref[...], be1_ref[...])
            y2 = jnp.dot(h, w2_ref[...], preferred_element_type=jnp.float32)
            return bn_relu(y2, g2_ref[...], be2_ref[...])

        # Image embedding (ResNet stand-in: single linear projection).
        i_e = (
            jnp.dot(img_ref[...], wi_ref[...],
                    preferred_element_type=jnp.float32)
            + bi_ref[...]
        )

        # Both text branches reuse the already-VMEM-resident w1/w2 tiles,
        # with per-branch BN statistics (matches running text_net twice).
        tp_e = text_branch(tp_ref[...])
        tn_e = text_branch(tn_ref[...])

        # Lane-dense embedding writebacks.
        ie_ref[...] = i_e
        tpe_ref[...] = tp_e
        tne_ref[...] = tn_e

        # F.pairwise_distance(p=2, eps=1e-6) + margin count.
        dp = i_e - tp_e + PD_EPS
        dn = i_e - tn_e + PD_EPS
        d_tp = jnp.sqrt(jnp.sum(dp * dp, axis=1, keepdims=True))   # (B, 1)
        d_tn = jnp.sqrt(jnp.sum(dn * dn, axis=1, keepdims=True))   # (B, 1)
        hit = (d_tn - d_tp > margin).astype(jnp.int32)
        corr_ref[...] = jnp.sum(hit, axis=(0, 1), keepdims=True)   # (1, 1)

    return fused_forward_kernel


# ---------------------------------------------------------------------------
# Parameters
# ---------------------------------------------------------------------------
def init_params(key, embedding_dims, img_feat_dim):
    """Matches Model.initialize_weights for extra_net:
    Linear.weight ~ N(0, 0.01), Linear.bias = 0, BN gamma = 1, beta = 0.
    (Linear biases before BN are omitted: zero at init AND exactly cancelled
    by train-mode BN mean subtraction.)"""
    k1, k2, k3 = jax.random.split(key, 3)
    w1 = 0.01 * jax.random.normal(k1, (TAG_DIM, 512), jnp.float32)
    # Zero-pad the 300-row contraction dim to 384 (3x128) for aligned layout.
    w1p = jnp.zeros((TAG_DIM_PAD, 512), jnp.float32).at[:TAG_DIM].set(w1)
    p = {
        # TextNet.fc1 : 300(->384) -> 512
        "w1": w1p,
        "g1": jnp.ones((1, 512), jnp.float32),
        "be1": jnp.zeros((1, 512), jnp.float32),
        # TextNet.fc2 : 512 -> embedding_dims
        "w2": 0.01 * jax.random.normal(k2, (512, embedding_dims), jnp.float32),
        "g2": jnp.ones((1, embedding_dims), jnp.float32),
        "be2": jnp.zeros((1, embedding_dims), jnp.float32),
        # image embedding stand-in (see TODO above)
        "wi": 0.01 * jax.random.normal(
            k3, (img_feat_dim, embedding_dims), jnp.float32),
        "bi": jnp.zeros((1, embedding_dims), jnp.float32),
    }
    return p


# ---------------------------------------------------------------------------
# Forward (single fused pallas_call)
# ---------------------------------------------------------------------------
def model_forward(params, image, tag_pos, tag_neg, lat, lon, margin=1.0):
    # lat / lon are accepted but unused, exactly as in the PyTorch forward.
    del lat, lon
    B = image.shape[0]
    E = params["wi"].shape[1]

    img_flat = image.reshape(B, -1)                       # NCHW -> (B, C*H*W)
    # Zero-pad tag features 300 -> 384 (rows of w1 beyond 300 are zero).
    pad = TAG_DIM_PAD - tag_pos.shape[1]
    tp_pad = jnp.pad(tag_pos, ((0, 0), (0, pad)))
    tn_pad = jnp.pad(tag_neg, ((0, 0), (0, pad)))

    i_e, tp_e, tn_e, corr = pl.pallas_call(
        make_fused_forward_kernel(margin),
        out_shape=(
            jax.ShapeDtypeStruct((B, E), jnp.float32),    # i_e
            jax.ShapeDtypeStruct((B, E), jnp.float32),    # tp_e
            jax.ShapeDtypeStruct((B, E), jnp.float32),    # tn_e
            jax.ShapeDtypeStruct((1, 1), jnp.int32),      # correct
        ),
        # Whole problem fits in one VMEM block at these shapes -> no grid.
        # TODO(synk): at real sizes (ResNet features, embedding_dims=1024,
        # large batch) the image-fc weight must be K-tiled with a grid + f32
        # accumulator and "parallel" batch semantics instead of one block.
        compiler_params=pltpu.CompilerParams(
            vmem_limit_bytes=64 * 1024 * 1024),
    )(
        img_flat, tp_pad, tn_pad,
        params["wi"], params["bi"],
        params["w1"], params["g1"], params["be1"],
        params["w2"], params["g2"], params["be2"],
    )
    return i_e, tp_e, tn_e, corr.reshape(1)


# ---------------------------------------------------------------------------
if __name__ == "__main__":
    B = 2
    EMBEDDING_DIMS = 128          # small stand-in for the default 1024
    C, H, W = 3, 16, 16

    key = jax.random.PRNGKey(0)
    k_img, k_tp, k_tn, k_param = jax.random.split(key, 4)

    image = jax.random.normal(k_img, (B, C, H, W), jnp.float32)   # NCHW
    tag_pos = jax.random.normal(k_tp, (B, TAG_DIM), jnp.float32)
    tag_neg = jax.random.normal(k_tn, (B, TAG_DIM), jnp.float32)
    lat = jnp.zeros((B,), jnp.float32)
    lon = jnp.zeros((B,), jnp.float32)

    params = init_params(k_param, EMBEDDING_DIMS, C * H * W)

    fwd = jax.jit(
        lambda p, im, tp, tn, la, lo: model_forward(p, im, tp, tn, la, lo,
                                                    margin=1.0)
    )
    i_e, tp_e, tn_e, correct = fwd(params, image, tag_pos, tag_neg, lat, lon)
    jax.block_until_ready((i_e, tp_e, tn_e, correct))

    assert i_e.shape == (B, EMBEDDING_DIMS)
    assert tp_e.shape == (B, EMBEDDING_DIMS)
    assert tn_e.shape == (B, EMBEDDING_DIMS)
    assert correct.shape == (1,) and correct.dtype == jnp.int32
    assert bool(jnp.all(tp_e >= 0.0)) and bool(jnp.all(tn_e >= 0.0))  # ReLU
    assert 0 <= int(correct[0]) <= B

    print("KERNEL_OK")
</pallas_src>

<mosaic_0001>
module attributes {stable_mosaic.version = 11 : i64} {
  func.func @fused_forward_kernel(%arg0: memref<2x768xf32, #tpu.memory_space<vmem>>, %arg1: memref<2x384xf32, #tpu.memory_space<vmem>>, %arg2: memref<2x384xf32, #tpu.memory_space<vmem>>, %arg3: memref<768x128xf32, #tpu.memory_space<vmem>>, %arg4: memref<1x128xf32, #tpu.memory_space<vmem>>, %arg5: memref<384x512xf32, #tpu.memory_space<vmem>>, %arg6: memref<1x512xf32, #tpu.memory_space<vmem>>, %arg7: memref<1x512xf32, #tpu.memory_space<vmem>>, %arg8: memref<512x128xf32, #tpu.memory_space<vmem>>, %arg9: memref<1x128xf32, #tpu.memory_space<vmem>>, %arg10: memref<1x128xf32, #tpu.memory_space<vmem>>, %arg11: memref<2x128xf32, #tpu.memory_space<vmem>>, %arg12: memref<2x128xf32, #tpu.memory_space<vmem>>, %arg13: memref<2x128xf32, #tpu.memory_space<vmem>>, %arg14: memref<1x1xi32, #tpu.memory_space<vmem>>) attributes {dimension_semantics = [], scalar_prefetch = 0 : i64, scratch_operands = 0 : i64, tpu.core_type = #tpu.core_type<tc>} {
    %c0 = arith.constant 0 : index
    %c0_0 = arith.constant 0 : index
    %0 = vector.load %arg0[%c0, %c0_0] : memref<2x768xf32, #tpu.memory_space<vmem>>, vector<2x768xf32>
    %c0_1 = arith.constant 0 : index
    %c0_2 = arith.constant 0 : index
    %1 = vector.load %arg3[%c0_1, %c0_2] : memref<768x128xf32, #tpu.memory_space<vmem>>, vector<768x128xf32>
    %cst = arith.constant dense<0.000000e+00> : vector<2x128xf32>
    %2 = tpu.matmul %0, %1, %cst {dimension_numbers = #tpu.dot_dimension_numbers<[1], [0], [0], [1], [0, 0, 1, 1], [], []>} : vector<2x768xf32>, vector<768x128xf32>, vector<2x128xf32> -> vector<2x128xf32>
    %c0_3 = arith.constant 0 : index
    %c0_4 = arith.constant 0 : index
    %3 = vector.load %arg4[%c0_3, %c0_4] : memref<1x128xf32, #tpu.memory_space<vmem>>, vector<1x128xf32>
    %4 = vector.broadcast %3 : vector<1x128xf32> to vector<2x128xf32>
    %5 = arith.addf %2, %4 : vector<2x128xf32>
    %c0_5 = arith.constant 0 : index
    %c0_6 = arith.constant 0 : index
    %6 = vector.load %arg1[%c0_5, %c0_6] : memref<2x384xf32, #tpu.memory_space<vmem>>, vector<2x384xf32>
    %c0_7 = arith.constant 0 : index
    %c0_8 = arith.constant 0 : index
    %7 = vector.load %arg5[%c0_7, %c0_8] : memref<384x512xf32, #tpu.memory_space<vmem>>, vector<384x512xf32>
    %cst_9 = arith.constant dense<0.000000e+00> : vector<2x512xf32>
    %8 = tpu.matmul %6, %7, %cst_9 {dimension_numbers = #tpu.dot_dimension_numbers<[1], [0], [0], [1], [0, 0, 1, 1], [], []>} : vector<2x384xf32>, vector<384x512xf32>, vector<2x512xf32> -> vector<2x512xf32>
    %c0_10 = arith.constant 0 : index
    %c0_11 = arith.constant 0 : index
    %9 = vector.load %arg6[%c0_10, %c0_11] : memref<1x512xf32, #tpu.memory_space<vmem>>, vector<1x512xf32>
    %c0_12 = arith.constant 0 : index
    %c0_13 = arith.constant 0 : index
    %10 = vector.load %arg7[%c0_12, %c0_13] : memref<1x512xf32, #tpu.memory_space<vmem>>, vector<1x512xf32>
    %cst_14 = arith.constant dense<0.000000e+00> : vector<512xf32>
    %11 = vector.multi_reduction <add>, %8, %cst_14 [0] : vector<2x512xf32> to vector<512xf32>
    %12 = vector.shape_cast %11 : vector<512xf32> to vector<1x512xf32>
    %cst_15 = arith.constant 2.000000e+00 : f32
    %13 = vector.broadcast %cst_15 : f32 to vector<1x512xf32>
    %14 = arith.divf %12, %13 : vector<1x512xf32>
    %15 = arith.mulf %8, %8 : vector<2x512xf32>
    %cst_16 = arith.constant dense<0.000000e+00> : vector<512xf32>
    %16 = vector.multi_reduction <add>, %15, %cst_16 [0] : vector<2x512xf32> to vector<512xf32>
    %17 = vector.shape_cast %16 : vector<512xf32> to vector<1x512xf32>
    %cst_17 = arith.constant 2.000000e+00 : f32
    %18 = vector.broadcast %cst_17 : f32 to vector<1x512xf32>
    %19 = arith.divf %17, %18 : vector<1x512xf32>
    %20 = arith.mulf %14, %14 : vector<1x512xf32>
    %21 = arith.subf %19, %20 : vector<1x512xf32>
    %cst_18 = arith.constant 1.000000e-03 : f32
    %22 = vector.broadcast %cst_18 : f32 to vector<1x512xf32>
    %23 = arith.addf %21, %22 : vector<1x512xf32>
    %24 = math.rsqrt %23 : vector<1x512xf32>
    %25 = arith.mulf %9, %24 : vector<1x512xf32>
    %26 = vector.broadcast %14 : vector<1x512xf32> to vector<2x512xf32>
    %27 = arith.subf %8, %26 : vector<2x512xf32>
    %28 = vector.broadcast %25 : vector<1x512xf32> to vector<2x512xf32>
    %29 = arith.mulf %27, %28 : vector<2x512xf32>
    %30 = vector.broadcast %10 : vector<1x512xf32> to vector<2x512xf32>
    %31 = arith.addf %29, %30 : vector<2x512xf32>
    %cst_19 = arith.constant 0.000000e+00 : f32
    %32 = vector.broadcast %cst_19 : f32 to vector<2x512xf32>
    %33 = arith.maximumf %31, %32 : vector<2x512xf32>
    %c0_20 = arith.constant 0 : index
    %c0_21 = arith.constant 0 : index
    %34 = vector.load %arg8[%c0_20, %c0_21] : memref<512x128xf32, #tpu.memory_space<vmem>>, vector<512x128xf32>
    %cst_22 = arith.constant dense<0.000000e+00> : vector<2x128xf32>
    %35 = tpu.matmul %33, %34, %cst_22 {dimension_numbers = #tpu.dot_dimension_numbers<[1], [0], [0], [1], [0, 0, 1, 1], [], []>} : vector<2x512xf32>, vector<512x128xf32>, vector<2x128xf32> -> vector<2x128xf32>
    %c0_23 = arith.constant 0 : index
    %c0_24 = arith.constant 0 : index
    %36 = vector.load %arg9[%c0_23, %c0_24] : memref<1x128xf32, #tpu.memory_space<vmem>>, vector<1x128xf32>
    %c0_25 = arith.constant 0 : index
    %c0_26 = arith.constant 0 : index
    %37 = vector.load %arg10[%c0_25, %c0_26] : memref<1x128xf32, #tpu.memory_space<vmem>>, vector<1x128xf32>
    %cst_27 = arith.constant dense<0.000000e+00> : vector<128xf32>
    %38 = vector.multi_reduction <add>, %35, %cst_27 [0] : vector<2x128xf32> to vector<128xf32>
    %39 = vector.shape_cast %38 : vector<128xf32> to vector<1x128xf32>
    %cst_28 = arith.constant 2.000000e+00 : f32
    %40 = vector.broadcast %cst_28 : f32 to vector<1x128xf32>
    %41 = arith.divf %39, %40 : vector<1x128xf32>
    %42 = arith.mulf %35, %35 : vector<2x128xf32>
    %cst_29 = arith.constant dense<0.000000e+00> : vector<128xf32>
    %43 = vector.multi_reduction <add>, %42, %cst_29 [0] : vector<2x128xf32> to vector<128xf32>
    %44 = vector.shape_cast %43 : vector<128xf32> to vector<1x128xf32>
    %cst_30 = arith.constant 2.000000e+00 : f32
    %45 = vector.broadcast %cst_30 : f32 to vector<1x128xf32>
    %46 = arith.divf %44, %45 : vector<1x128xf32>
    %47 = arith.mulf %41, %41 : vector<1x128xf32>
    %48 = arith.subf %46, %47 : vector<1x128xf32>
    %cst_31 = arith.constant 1.000000e-03 : f32
    %49 = vector.broadcast %cst_31 : f32 to vector<1x128xf32>
    %50 = arith.addf %48, %49 : vector<1x128xf32>
    %51 = math.rsqrt %50 : vector<1x128xf32>
    %52 = arith.mulf %36, %51 : vector<1x128xf32>
    %53 = vector.broadcast %41 : vector<1x128xf32> to vector<2x128xf32>
    %54 = arith.subf %35, %53 : vector<2x128xf32>
    %55 = vector.broadcast %52 : vector<1x128xf32> to vector<2x128xf32>
    %56 = arith.mulf %54, %55 : vector<2x128xf32>
    %57 = vector.broadcast %37 : vector<1x128xf32> to vector<2x128xf32>
    %58 = arith.addf %56, %57 : vector<2x128xf32>
    %cst_32 = arith.constant 0.000000e+00 : f32
    %59 = vector.broadcast %cst_32 : f32 to vector<2x128xf32>
    %60 = arith.maximumf %58, %59 : vector<2x128xf32>
    %c0_33 = arith.constant 0 : index
    %c0_34 = arith.constant 0 : index
    %61 = vector.load %arg2[%c0_33, %c0_34] : memref<2x384xf32, #tpu.memory_space<vmem>>, vector<2x384xf32>
    %c0_35 = arith.constant 0 : index
    %c0_36 = arith.constant 0 : index
    %62 = vector.load %arg5[%c0_35, %c0_36] : memref<384x512xf32, #tpu.memory_space<vmem>>, vector<384x512xf32>
    %cst_37 = arith.constant dense<0.000000e+00> : vector<2x512xf32>
    %63 = tpu.matmul %61, %62, %cst_37 {dimension_numbers = #tpu.dot_dimension_numbers<[1], [0], [0], [1], [0, 0, 1, 1], [], []>} : vector<2x384xf32>, vector<384x512xf32>, vector<2x512xf32> -> vector<2x512xf32>
    %c0_38 = arith.constant 0 : index
    %c0_39 = arith.constant 0 : index
    %64 = vector.load %arg6[%c0_38, %c0_39] : memref<1x512xf32, #tpu.memory_space<vmem>>, vector<1x512xf32>
    %c0_40 = arith.constant 0 : index
    %c0_41 = arith.constant 0 : index
    %65 = vector.load %arg7[%c0_40, %c0_41] : memref<1x512xf32, #tpu.memory_space<vmem>>, vector<1x512xf32>
    %cst_42 = arith.constant dense<0.000000e+00> : vector<512xf32>
    %66 = vector.multi_reduction <add>, %63, %cst_42 [0] : vector<2x512xf32> to vector<512xf32>
    %67 = vector.shape_cast %66 : vector<512xf32> to vector<1x512xf32>
    %cst_43 = arith.constant 2.000000e+00 : f32
    %68 = vector.broadcast %cst_43 : f32 to vector<1x512xf32>
    %69 = arith.divf %67, %68 : vector<1x512xf32>
    %70 = arith.mulf %63, %63 : vector<2x512xf32>
    %cst_44 = arith.constant dense<0.000000e+00> : vector<512xf32>
    %71 = vector.multi_reduction <add>, %70, %cst_44 [0] : vector<2x512xf32> to vector<512xf32>
    %72 = vector.shape_cast %71 : vector<512xf32> to vector<1x512xf32>
    %cst_45 = arith.constant 2.000000e+00 : f32
    %73 = vector.broadcast %cst_45 : f32 to vector<1x512xf32>
    %74 = arith.divf %72, %73 : vector<1x512xf32>
    %75 = arith.mulf %69, %69 : vector<1x512xf32>
    %76 = arith.subf %74, %75 : vector<1x512xf32>
    %cst_46 = arith.constant 1.000000e-03 : f32
    %77 = vector.broadcast %cst_46 : f32 to vector<1x512xf32>
    %78 = arith.addf %76, %77 : vector<1x512xf32>
    %79 = math.rsqrt %78 : vector<1x512xf32>
    %80 = arith.mulf %64, %79 : vector<1x512xf32>
    %81 = vector.broadcast %69 : vector<1x512xf32> to vector<2x512xf32>
    %82 = arith.subf %63, %81 : vector<2x512xf32>
    %83 = vector.broadcast %80 : vector<1x512xf32> to vector<2x512xf32>
    %84 = arith.mulf %82, %83 : vector<2x512xf32>
    %85 = vector.broadcast %65 : vector<1x512xf32> to vector<2x512xf32>
    %86 = arith.addf %84, %85 : vector<2x512xf32>
    %cst_47 = arith.constant 0.000000e+00 : f32
    %87 = vector.broadcast %cst_47 : f32 to vector<2x512xf32>
    %88 = arith.maximumf %86, %87 : vector<2x512xf32>
    %c0_48 = arith.constant 0 : index
    %c0_49 = arith.constant 0 : index
    %89 = vector.load %arg8[%c0_48, %c0_49] : memref<512x128xf32, #tpu.memory_space<vmem>>, vector<512x128xf32>
    %cst_50 = arith.constant dense<0.000000e+00> : vector<2x128xf32>
    %90 = tpu.matmul %88, %89, %cst_50 {dimension_numbers = #tpu.dot_dimension_numbers<[1], [0], [0], [1], [0, 0, 1, 1], [], []>} : vector<2x512xf32>, vector<512x128xf32>, vector<2x128xf32> -> vector<2x128xf32>
    %c0_51 = arith.constant 0 : index
    %c0_52 = arith.constant 0 : index
    %91 = vector.load %arg9[%c0_51, %c0_52] : memref<1x128xf32, #tpu.memory_space<vmem>>, vector<1x128xf32>
    %c0_53 = arith.constant 0 : index
    %c0_54 = arith.constant 0 : index
    %92 = vector.load %arg10[%c0_53, %c0_54] : memref<1x128xf32, #tpu.memory_space<vmem>>, vector<1x128xf32>
    %cst_55 = arith.constant dense<0.000000e+00> : vector<128xf32>
    %93 = vector.multi_reduction <add>, %90, %cst_55 [0] : vector<2x128xf32> to vector<128xf32>
    %94 = vector.shape_cast %93 : vector<128xf32> to vector<1x128xf32>
    %cst_56 = arith.constant 2.000000e+00 : f32
    %95 = vector.broadcast %cst_56 : f32 to vector<1x128xf32>
    %96 = arith.divf %94, %95 : vector<1x128xf32>
    %97 = arith.mulf %90, %90 : vector<2x128xf32>
    %cst_57 = arith.constant dense<0.000000e+00> : vector<128xf32>
    %98 = vector.multi_reduction <add>, %97, %cst_57 [0] : vector<2x128xf32> to vector<128xf32>
    %99 = vector.shape_cast %98 : vector<128xf32> to vector<1x128xf32>
    %cst_58 = arith.constant 2.000000e+00 : f32
    %100 = vector.broadcast %cst_58 : f32 to vector<1x128xf32>
    %101 = arith.divf %99, %100 : vector<1x128xf32>
    %102 = arith.mulf %96, %96 : vector<1x128xf32>
    %103 = arith.subf %101, %102 : vector<1x128xf32>
    %cst_59 = arith.constant 1.000000e-03 : f32
    %104 = vector.broadcast %cst_59 : f32 to vector<1x128xf32>
    %105 = arith.addf %103, %104 : vector<1x128xf32>
    %106 = math.rsqrt %105 : vector<1x128xf32>
    %107 = arith.mulf %91, %106 : vector<1x128xf32>
    %108 = vector.broadcast %96 : vector<1x128xf32> to vector<2x128xf32>
    %109 = arith.subf %90, %108 : vector<2x128xf32>
    %110 = vector.broadcast %107 : vector<1x128xf32> to vector<2x128xf32>
    %111 = arith.mulf %109, %110 : vector<2x128xf32>
    %112 = vector.broadcast %92 : vector<1x128xf32> to vector<2x128xf32>
    %113 = arith.addf %111, %112 : vector<2x128xf32>
    %cst_60 = arith.constant 0.000000e+00 : f32
    %114 = vector.broadcast %cst_60 : f32 to vector<2x128xf32>
    %115 = arith.maximumf %113, %114 : vector<2x128xf32>
    %c0_61 = arith.constant 0 : index
    %c0_62 = arith.constant 0 : index
    %116 = vector.load %arg11[%c0_61, %c0_62] : memref<2x128xf32, #tpu.memory_space<vmem>>, vector<2x128xf32>
    tpu.vector_store %arg11[%c0_61, %c0_62], %5 {strides = array<i32>} : memref<2x128xf32, #tpu.memory_space<vmem>>, vector<2x128xf32>,
    %c0_63 = arith.constant 0 : index
    %c0_64 = arith.constant 0 : index
    %117 = vector.load %arg12[%c0_63, %c0_64] : memref<2x128xf32, #tpu.memory_space<vmem>>, vector<2x128xf32>
    tpu.vector_store %arg12[%c0_63, %c0_64], %60 {strides = array<i32>} : memref<2x128xf32, #tpu.memory_space<vmem>>, vector<2x128xf32>,
    %c0_65 = arith.constant 0 : index
    %c0_66 = arith.constant 0 : index
    %118 = vector.load %arg13[%c0_65, %c0_66] : memref<2x128xf32, #tpu.memory_space<vmem>>, vector<2x128xf32>
    tpu.vector_store %arg13[%c0_65, %c0_66], %115 {strides = array<i32>} : memref<2x128xf32, #tpu.memory_space<vmem>>, vector<2x128xf32>,
    %119 = arith.subf %5, %60 : vector<2x128xf32>
    %cst_67 = arith.constant 9.99999997E-7 : f32
    %120 = vector.broadcast %cst_67 : f32 to vector<2x128xf32>
    %121 = arith.addf %119, %120 : vector<2x128xf32>
    %122 = arith.subf %5, %115 : vector<2x128xf32>
    %cst_68 = arith.constant 9.99999997E-7 : f32
    %123 = vector.broadcast %cst_68 : f32 to vector<2x128xf32>
    %124 = arith.addf %122, %123 : vector<2x128xf32>
    %125 = arith.mulf %121, %121 : vector<2x128xf32>
    %cst_69 = arith.constant dense<0.000000e+00> : vector<2xf32>
    %126 = vector.multi_reduction <add>, %125, %cst_69 [1] : vector<2x128xf32> to vector<2xf32>
    %127 = vector.shape_cast %126 : vector<2xf32> to vector<2x1xf32>
    %128 = math.sqrt %127 : vector<2x1xf32>
    %129 = arith.mulf %124, %124 : vector<2x128xf32>
    %cst_70 = arith.constant dense<0.000000e+00> : vector<2xf32>
    %130 = vector.multi_reduction <add>, %129, %cst_70 [1] : vector<2x128xf32> to vector<2xf32>
    %131 = vector.shape_cast %130 : vector<2xf32> to vector<2x1xf32>
    %132 = math.sqrt %131 : vector<2x1xf32>
    %133 = arith.subf %132, %128 : vector<2x1xf32>
    %cst_71 = arith.constant 1.000000e+00 : f32
    %134 = vector.broadcast %cst_71 : f32 to vector<2x1xf32>
    %135 = arith.cmpf ogt, %133, %134 : vector<2x1xf32>
    %136 = arith.extui %135 : vector<2x1xi1> to vector<2x1xi32>
    %137 = vector.shape_cast %136 : vector<2x1xi32> to vector<1x2x1xi32>
    %cst_72 = arith.constant dense<0> : vector<1xi32>
    %138 = vector.multi_reduction <add>, %137, %cst_72 [1, 2] : vector<1x2x1xi32> to vector<1xi32>
    %139 = vector.shape_cast %138 : vector<1xi32> to vector<1x1x1xi32>
    %140 = vector.extract %139[0, 0, 0] : i32 from vector<1x1x1xi32>
    %141 = vector.broadcast %140 : i32 to vector<1x1xi32>
    %c0_73 = arith.constant 0 : index
    %c0_74 = arith.constant 0 : index
    %142 = vector.load %arg14[%c0_73, %c0_74] : memref<1x1xi32, #tpu.memory_space<vmem>>, vector<1x1xi32>
    tpu.vector_store %arg14[%c0_73, %c0_74], %141 {strides = array<i32>} : memref<1x1xi32, #tpu.memory_space<vmem>>, vector<1x1xi32>,
    return
  }
}

</mosaic_0001>

<llo_original>
// kernel: _lambda_.1
$region0: #{_lambda_.1}
  #allocation0 [shape = 'u32[]', space=smem, size = 0x4, offset = 0x4, fixed_abs, tag = 'smem constant byte address 0x4 - core index']
  #allocation1 [shape = 'u32[144,128]{1,0:T(1,128)}', space=vmem, size = 0x12000, scoped, tag = 'internal scratch']
  %s0 = inlined_call_operand.hbm [shape: f32[2,768], index: 0, kind: input, shape index: {}]
  %s1 = inlined_call_operand.hbm [shape: f32[2,384], index: 1, kind: input, shape index: {}]
  %s2 = inlined_call_operand.hbm [shape: f32[2,384], index: 2, kind: input, shape index: {}]
  %s3 = inlined_call_operand.hbm [shape: f32[768,128], index: 3, kind: input, shape index: {}]
  %s4 = inlined_call_operand.hbm [shape: f32[1,128], index: 4, kind: input, shape index: {}]
  %s5 = inlined_call_operand.hbm [shape: f32[384,512], index: 5, kind: input, shape index: {}]
  %s6 = inlined_call_operand.hbm [shape: f32[1,512], index: 6, kind: input, shape index: {}]
  %s7 = inlined_call_operand.hbm [shape: f32[1,512], index: 7, kind: input, shape index: {}]
  %s8 = inlined_call_operand.hbm [shape: f32[512,128], index: 8, kind: input, shape index: {}]
  %s9 = inlined_call_operand.hbm [shape: f32[1,128], index: 9, kind: input, shape index: {}]
  %s10 = inlined_call_operand.hbm [shape: f32[1,128], index: 10, kind: input, shape index: {}]
  %s11 = inlined_call_operand.hbm [shape: f32[2,128], index: 11, kind: output, shape index: {0}]
  %s12 = inlined_call_operand.hbm [shape: f32[2,128], index: 12, kind: output, shape index: {1}]
  %s13 = inlined_call_operand.hbm [shape: f32[2,128], index: 13, kind: output, shape index: {2}]
  %s14 = inlined_call_operand.hbm [shape: s32[1,1], index: 14, kind: output, shape index: {3}]
  %15 = xla_tuple %s11, %s12, %s13, %s14
  %s16 = sld [smem:[#allocation0]]
  $region122: #{_lambda_.1} parent=0
    _
  %s18 = ssub.s32 1, %s16
  %s19 = scalar_select 0, %s18, %s16
  $region1: #{_lambda_.1} parent=0
    #allocation2 [shape = 'u8[6144]{0}', space=vmem, size = 0x1800, scoped, tag = 'input window, operand 0, single buffered']
    #allocation3 [shape = 's32[1]{0}', space=sflag, size = 0x4, scoped, tag = 'scoped memory for _lambda_.1']
    #allocation4 [shape = 's32[1]{0}', space=sflag, size = 0x4, scoped, tag = 'scoped memory for _lambda_.1']
    #allocation5 [shape = 'u8[3072]{0}', space=vmem, size = 0xc00, scoped, tag = 'input window, operand 1, single buffered']
    #allocation6 [shape = 's32[1]{0}', space=sflag, size = 0x4, scoped, tag = 'scoped memory for _lambda_.1']
    #allocation7 [shape = 'u8[3072]{0}', space=vmem, size = 0xc00, scoped, tag = 'input window, operand 2, single buffered']
    #allocation8 [shape = 'u8[393216]{0}', space=vmem, size = 0x60000, scoped, tag = 'input window, operand 3, single buffered']
    #allocation9 [shape = 's32[1]{0}', space=sflag, size = 0x4, scoped, tag = 'scoped memory for _lambda_.1']
    #allocation10 [shape = 'u8[512]{0}', space=vmem, size = 0x400, scoped, tag = 'input window, operand 4, single buffered']
    #allocation11 [shape = 'u8[786432]{0}', space=vmem, size = 0xc0000, scoped, tag = 'input window, operand 5, single buffered']
    #allocation12 [shape = 's32[1]{0}', space=sflag, size = 0x4, scoped, tag = 'scoped memory for _lambda_.1']
    #allocation13 [shape = 'u8[2048]{0}', space=vmem, size = 0x800, scoped, tag = 'input window, operand 6, single buffered']
    #allocation14 [shape = 'u8[2048]{0}', space=vmem, size = 0x800, scoped, tag = 'input window, operand 7, single buffered']
    #allocation15 [shape = 's32[1]{0}', space=sflag, size = 0x4, scoped, tag = 'scoped memory for _lambda_.1']
    #allocation16 [shape = 'u8[262144]{0}', space=vmem, size = 0x40000, scoped, tag = 'input window, operand 8, single buffered']
    #allocation17 [shape = 'u8[512]{0}', space=vmem, size = 0x400, scoped, tag = 'input window, operand 9, single buffered']
    #allocation18 [shape = 's32[1]{0}', space=sflag, size = 0x4, scoped, tag = 'scoped memory for _lambda_.1']
    #allocation19 [shape = 'u8[512]{0}', space=vmem, size = 0x400, scoped, tag = 'input window, operand 10, single buffered']
    #allocation20 [shape = 'u8[1024]{0}', space=vmem, size = 0x400, scoped, tag = 'output window, operand 0, single buffered']
    #allocation21 [shape = 'u8[1024]{0}', space=vmem, size = 0x400, scoped, tag = 'output window, operand 1, single buffered']
    #allocation22 [shape = 's32[1]{0}', space=sflag, size = 0x4, scoped, tag = 'scoped memory for _lambda_.1']
    #allocation23 [shape = 'u8[1024]{0}', space=vmem, size = 0x400, scoped, tag = 'output window, operand 2, single buffered']
    #allocation24 [shape = 'u8[512]{0}', space=vmem, size = 0x400, scoped, tag = 'output window, operand 3, single buffered']
    #allocation25 [shape = 's32[1]{0}', space=sflag, size = 0x4, scoped, tag = 'scoped memory for _lambda_.1']
    %20 = vsyncpa [#allocation3], 0
    %21 = vsyncpa [#allocation6], 0
    %22 = vsyncpa [#allocation9], 0
    %23 = vsyncpa [#allocation12], 0
    %24 = vsyncpa [#allocation15], 0
    %25 = vsyncpa [#allocation18], 0
    %26 = vsyncpa [#allocation4], 0
    %27 = vsyncpa [#allocation22], 0
    %28 = vsyncpa [#allocation25], 0
    // Predicated region
    $region2: #{_lambda_.1} parent=1 // pred_check
      _
    $region3: #{_lambda_.1} parent=1 // pred_check_branch
      %30 = sbr.rel (0) target = $region5
    $region4: #{_lambda_.1} parent=1 // pred_region
      %s32 = ssub.s32 192, 192
      %33 = vsyncadd [#allocation3], %s32
      %s35 = sshll.u32 [#allocation2], 4
      %s36 = int_to_ptr.vmem [resolvable:$true] %s35
      %38 = dma.hbm_to_vmem [thread:$0]  %s0, 192, %s36, [#allocation3]
    $region5: #{_lambda_.1} parent=1 // pred_fallthru
      _
    // Predicated region
    $region6: #{_lambda_.1} parent=1 // pred_check
      _
    $region7: #{_lambda_.1} parent=1 // pred_check_branch
      %40 = sbr.rel (0) target = $region9
    $region8: #{_lambda_.1} parent=1 // pred_region
      %s42 = ssub.s32 96, 96
      %43 = vsyncadd [#allocation6], %s42
      %s45 = sshll.u32 [#allocation5], 4
      %s46 = int_to_ptr.vmem [resolvable:$true] %s45
      %48 = dma.hbm_to_vmem [thread:$0]  %s1, 96, %s46, [#allocation6]
    $region9: #{_lambda_.1} parent=1 // pred_fallthru
      _
    // Predicated region
    $region10: #{_lambda_.1} parent=1 // pred_check
      _
    $region11: #{_lambda_.1} parent=1 // pred_check_branch
      %50 = sbr.rel (0) target = $region13
    $region12: #{_lambda_.1} parent=1 // pred_region
      %s52 = ssub.s32 96, 96
      %53 = vsyncadd [#allocation6], %s52
      %s55 = sshll.u32 [#allocation7], 4
      %s56 = int_to_ptr.vmem [resolvable:$true] %s55
      %58 = dma.hbm_to_vmem [thread:$0]  %s2, 96, %s56, [#allocation6]
    $region13: #{_lambda_.1} parent=1 // pred_fallthru
      _
    // Predicated region
    $region14: #{_lambda_.1} parent=1 // pred_check
      _
    $region15: #{_lambda_.1} parent=1 // pred_check_branch
      %60 = sbr.rel (0) target = $region17
    $region16: #{_lambda_.1} parent=1 // pred_region
      %s62 = ssub.s32 12288, 12288
      %63 = vsyncadd [#allocation9], %s62
      %s64 = sshll.u32 [#allocation8], 4
      %s65 = int_to_ptr.vmem [resolvable:$true] %s64
      %70 = dma.hbm_to_vmem [thread:$0]  %s3, 12288, %s65, [#allocation9], 128, 128, 8
    $region17: #{_lambda_.1} parent=1 // pred_fallthru
      _
    // Predicated region
    $region18: #{_lambda_.1} parent=1 // pred_check
      _
    $region19: #{_lambda_.1} parent=1 // pred_check_branch
      %72 = sbr.rel (0) target = $region21
    $region20: #{_lambda_.1} parent=1 // pred_region
      %s74 = ssub.s32 16, 16
      %75 = vsyncadd [#allocation9], %s74
      %s77 = sshll.u32 [#allocation10], 4
      %s78 = int_to_ptr.vmem [resolvable:$true] %s77
      %80 = dma.hbm_to_vmem [thread:$0]  %s4, 16, %s78, [#allocation9]
    $region21: #{_lambda_.1} parent=1 // pred_fallthru
      _
    // Predicated region
    $region22: #{_lambda_.1} parent=1 // pred_check
      _
    $region23: #{_lambda_.1} parent=1 // pred_check_branch
      %82 = sbr.rel (0) target = $region25
    $region24: #{_lambda_.1} parent=1 // pred_region
      %s84 = ssub.s32 24576, 24576
      %85 = vsyncadd [#allocation12], %s84
      %s86 = sshll.u32 [#allocation11], 4
      %s87 = int_to_ptr.vmem [resolvable:$true] %s86
      %92 = dma.hbm_to_vmem [thread:$0]  %s5, 24576, %s87, [#allocation12], 512, 512, 32
    $region25: #{_lambda_.1} parent=1 // pred_fallthru
      _
    // Predicated region
    $region26: #{_lambda_.1} parent=1 // pred_check
      _
    $region27: #{_lambda_.1} parent=1 // pred_check_branch
      %94 = sbr.rel (0) target = $region29
    $region28: #{_lambda_.1} parent=1 // pred_region
      %s96 = ssub.s32 64, 64
      %97 = vsyncadd [#allocation12], %s96
      %s99 = sshll.u32 [#allocation13], 4
      %s100 = int_to_ptr.vmem [resolvable:$true] %s99
      %102 = dma.hbm_to_vmem [thread:$0]  %s6, 64, %s100, [#allocation12]
    $region29: #{_lambda_.1} parent=1 // pred_fallthru
      _
    // Predicated region
    $region30: #{_lambda_.1} parent=1 // pred_check
      _
    $region31: #{_lambda_.1} parent=1 // pred_check_branch
      %104 = sbr.rel (0) target = $region33
    $region32: #{_lambda_.1} parent=1 // pred_region
      %s106 = ssub.s32 64, 64
      %107 = vsyncadd [#allocation15], %s106
      %s109 = sshll.u32 [#allocation14], 4
      %s110 = int_to_ptr.vmem [resolvable:$true] %s109
      %112 = dma.hbm_to_vmem [thread:$0]  %s7, 64, %s110, [#allocation15]
    $region33: #{_lambda_.1} parent=1 // pred_fallthru
      _
    // Predicated region
    $region34: #{_lambda_.1} parent=1 // pred_check
      _
    $region35: #{_lambda_.1} parent=1 // pred_check_branch
      %114 = sbr.rel (0) target = $region37
    $region36: #{_lambda_.1} parent=1 // pred_region
      %s116 = ssub.s32 8192, 8192
      %117 = vsyncadd [#allocation15], %s116
      %s118 = sshll.u32 [#allocation16], 4
      %s119 = int_to_ptr.vmem [resolvable:$true] %s118
      %124 = dma.hbm_to_vmem [thread:$0]  %s8, 8192, %s119, [#allocation15], 128, 128, 8
    $region37: #{_lambda_.1} parent=1 // pred_fallthru
      _
    // Predicated region
    $region38: #{_lambda_.1} parent=1 // pred_check
      _
    $region39: #{_lambda_.1} parent=1 // pred_check_branch
      %126 = sbr.rel (0) target = $region41
    $region40: #{_lambda_.1} parent=1 // pred_region
      %s128 = ssub.s32 16, 16
      %129 = vsyncadd [#allocation18], %s128
      %s131 = sshll.u32 [#allocation17], 4
      %s132 = int_to_ptr.vmem [resolvable:$true] %s131
      %134 = dma.hbm_to_vmem [thread:$0]  %s9, 16, %s132, [#allocation18]
    $region41: #{_lambda_.1} parent=1 // pred_fallthru
      _
    // Predicated region
    $region42: #{_lambda_.1} parent=1 // pred_check
      _
    $region43: #{_lambda_.1} parent=1 // pred_check_branch
      %136 = sbr.rel (0) target = $region45
    $region44: #{_lambda_.1} parent=1 // pred_region
      %s138 = ssub.s32 16, 16
      %139 = vsyncadd [#allocation18], %s138
      %s141 = sshll.u32 [#allocation19], 4
      %s142 = int_to_ptr.vmem [resolvable:$true] %s141
      %144 = dma.hbm_to_vmem [thread:$0]  %s10, 16, %s142, [#allocation18]
    $region45: #{_lambda_.1} parent=1 // pred_fallthru
      _
    // Predicated region
    $region46: #{_lambda_.1} parent=1 // pred_check
      _
    $region47: #{_lambda_.1} parent=1 // pred_check_branch
      %146 = sbr.rel (0) target = $region49
    $region48: #{_lambda_.1} parent=1 // pred_region
      %147 = dma.done [#allocation3], 192
    $region49: #{_lambda_.1} parent=1 // pred_fallthru
      _
    // Predicated region
    $region50: #{_lambda_.1} parent=1 // pred_check
      _
    $region51: #{_lambda_.1} parent=1 // pred_check_branch
      %149 = sbr.rel (0) target = $region53
    $region52: #{_lambda_.1} parent=1 // pred_region
      %150 = dma.done [#allocation6], 96
    $region53: #{_lambda_.1} parent=1 // pred_fallthru
      _
    // Predicated region
    $region54: #{_lambda_.1} parent=1 // pred_check
      _
    $region55: #{_lambda_.1} parent=1 // pred_check_branch
      %152 = sbr.rel (0) target = $region57
    $region56: #{_lambda_.1} parent=1 // pred_region
      %153 = dma.done [#allocation6], 96
    $region57: #{_lambda_.1} parent=1 // pred_fallthru
      _
    // Predicated region
    $region58: #{_lambda_.1} parent=1 // pred_check
      _
    $region59: #{_lambda_.1} parent=1 // pred_check_branch
      %155 = sbr.rel (0) target = $region61
    $region60: #{_lambda_.1} parent=1 // pred_region
      %156 = dma.done [#allocation9], 12288
    $region61: #{_lambda_.1} parent=1 // pred_fallthru
      _
    // Predicated region
    $region62: #{_lambda_.1} parent=1 // pred_check
      _
    $region63: #{_lambda_.1} parent=1 // pred_check_branch
      %158 = sbr.rel (0) target = $region65
    $region64: #{_lambda_.1} parent=1 // pred_region
      %159 = dma.done [#allocation9], 16
    $region65: #{_lambda_.1} parent=1 // pred_fallthru
      _
    // Predicated region
    $region66: #{_lambda_.1} parent=1 // pred_check
      _
    $region67: #{_lambda_.1} parent=1 // pred_check_branch
      %161 = sbr.rel (0) target = $region69
    $region68: #{_lambda_.1} parent=1 // pred_region
      %162 = dma.done [#allocation12], 24576
    $region69: #{_lambda_.1} parent=1 // pred_fallthru
      _
    // Predicated region
    $region70: #{_lambda_.1} parent=1 // pred_check
      _
    $region71: #{_lambda_.1} parent=1 // pred_check_branch
      %164 = sbr.rel (0) target = $region73
    $region72: #{_lambda_.1} parent=1 // pred_region
      %165 = dma.done [#allocation12], 64
    $region73: #{_lambda_.1} parent=1 // pred_fallthru
      _
    // Predicated region
    $region74: #{_lambda_.1} parent=1 // pred_check
      _
    $region75: #{_lambda_.1} parent=1 // pred_check_branch
      %167 = sbr.rel (0) target = $region77
    $region76: #{_lambda_.1} parent=1 // pred_region
      %168 = dma.done [#allocation15], 64
    $region77: #{_lambda_.1} parent=1 // pred_fallthru
      _
    // Predicated region
    $region78: #{_lambda_.1} parent=1 // pred_check
      _
    $region79: #{_lambda_.1} parent=1 // pred_check_branch
      %170 = sbr.rel (0) target = $region81
    $region80: #{_lambda_.1} parent=1 // pred_region
      %171 = dma.done [#allocation15], 8192
    $region81: #{_lambda_.1} parent=1 // pred_fallthru
      _
    // Predicated region
    $region82: #{_lambda_.1} parent=1 // pred_check
      _
    $region83: #{_lambda_.1} parent=1 // pred_check_branch
      %173 = sbr.rel (0) target = $region85
    $region84: #{_lambda_.1} parent=1 // pred_region
      %174 = dma.done [#allocation18], 16
    $region85: #{_lambda_.1} parent=1 // pred_fallthru
      _
    // Predicated region
    $region86: #{_lambda_.1} parent=1 // pred_check
      _
    $region87: #{_lambda_.1} parent=1 // pred_check_branch
      %176 = sbr.rel (0) target = $region89
    $region88: #{_lambda_.1} parent=1 // pred_region
      %177 = dma.done [#allocation18], 16
    $region89: #{_lambda_.1} parent=1 // pred_fallthru
      _
    %v178 = vld [vmem:[#allocation2] sm:$0xff]
    %v179 = vld [vmem:[#allocation2 + $0x8] sm:$0xf]
    %v180 = vld [vmem:[#allocation8] sm:$0xff]
    %v181 = vld [vmem:[#allocation8 + $0x8] sm:$0xff]
    %v182 = vld [vmem:[#allocation8 + $0x10] sm:$0xff]
    %v183 = vld [vmem:[#allocation8 + $0x18] sm:$0xff]
    %v184 = vld [vmem:[#allocation8 + $0x20] sm:$0xff]
    %v185 = vld [vmem:[#allocation8 + $0x28] sm:$0xff]
    %v186 = vld [vmem:[#allocation8 + $0x30] sm:$0xff]
    %v187 = vld [vmem:[#allocation8 + $0x38] sm:$0xff]
    %v188 = vld [vmem:[#allocation8 + $0x40] sm:$0xff]
    %v189 = vld [vmem:[#allocation8 + $0x48] sm:$0xff]
    %v190 = vld [vmem:[#allocation8 + $0x50] sm:$0xff]
    %v191 = vld [vmem:[#allocation8 + $0x58] sm:$0xff]
    %v192 = vld [vmem:[#allocation8 + $0x60] sm:$0xff]
    %v193 = vld [vmem:[#allocation8 + $0x68] sm:$0xff]
    %v194 = vld [vmem:[#allocation8 + $0x70] sm:$0xff]
    %v195 = vld [vmem:[#allocation8 + $0x78] sm:$0xff]
    %v196 = vld [vmem:[#allocation8 + $0x80] sm:$0xff]
    %v197 = vld [vmem:[#allocation8 + $0x88] sm:$0xff]
    %v198 = vld [vmem:[#allocation8 + $0x90] sm:$0xff]
    %v199 = vld [vmem:[#allocation8 + $0x98] sm:$0xff]
    %v200 = vld [vmem:[#allocation8 + $0xa0] sm:$0xff]
    %v201 = vld [vmem:[#allocation8 + $0xa8] sm:$0xff]
    %v202 = vld [vmem:[#allocation8 + $0xb0] sm:$0xff]
    %v203 = vld [vmem:[#allocation8 + $0xb8] sm:$0xff]
    %v204 = vld [vmem:[#allocation8 + $0xc0] sm:$0xff]
    %v205 = vld [vmem:[#allocation8 + $0xc8] sm:$0xff]
    %v206 = vld [vmem:[#allocation8 + $0xd0] sm:$0xff]
    %v207 = vld [vmem:[#allocation8 + $0xd8] sm:$0xff]
    %v208 = vld [vmem:[#allocation8 + $0xe0] sm:$0xff]
    %v209 = vld [vmem:[#allocation8 + $0xe8] sm:$0xff]
    %v210 = vld [vmem:[#allocation8 + $0xf0] sm:$0xff]
    %v211 = vld [vmem:[#allocation8 + $0xf8] sm:$0xff]
    %v212 = vld [vmem:[#allocation8 + $0x100] sm:$0xff]
    %v213 = vld [vmem:[#allocation8 + $0x108] sm:$0xff]
    %v214 = vld [vmem:[#allocation8 + $0x110] sm:$0xff]
    %v215 = vld [vmem:[#allocation8 + $0x118] sm:$0xff]
    %v216 = vld [vmem:[#allocation8 + $0x120] sm:$0xff]
    %v217 = vld [vmem:[#allocation8 + $0x128] sm:$0xff]
    %v218 = vld [vmem:[#allocation8 + $0x130] sm:$0xff]
    %v219 = vld [vmem:[#allocation8 + $0x138] sm:$0xff]
    %v220 = vld [vmem:[#allocation8 + $0x140] sm:$0xff]
    %v221 = vld [vmem:[#allocation8 + $0x148] sm:$0xff]
    %v222 = vld [vmem:[#allocation8 + $0x150] sm:$0xff]
    %v223 = vld [vmem:[#allocation8 + $0x158] sm:$0xff]
    %v224 = vld [vmem:[#allocation8 + $0x160] sm:$0xff]
    %v225 = vld [vmem:[#allocation8 + $0x168] sm:$0xff]
    %v226 = vld [vmem:[#allocation8 + $0x170] sm:$0xff]
    %v227 = vld [vmem:[#allocation8 + $0x178] sm:$0xff]
    %v228 = vld [vmem:[#allocation8 + $0x180] sm:$0xff]
    %v229 = vld [vmem:[#allocation8 + $0x188] sm:$0xff]
    %v230 = vld [vmem:[#allocation8 + $0x190] sm:$0xff]
    %v231 = vld [vmem:[#allocation8 + $0x198] sm:$0xff]
    %v232 = vld [vmem:[#allocation8 + $0x1a0] sm:$0xff]
    %v233 = vld [vmem:[#allocation8 + $0x1a8] sm:$0xff]
    %v234 = vld [vmem:[#allocation8 + $0x1b0] sm:$0xff]
    %v235 = vld [vmem:[#allocation8 + $0x1b8] sm:$0xff]
    %v236 = vld [vmem:[#allocation8 + $0x1c0] sm:$0xff]
    %v237 = vld [vmem:[#allocation8 + $0x1c8] sm:$0xff]
    %v238 = vld [vmem:[#allocation8 + $0x1d0] sm:$0xff]
    %v239 = vld [vmem:[#allocation8 + $0x1d8] sm:$0xff]
    %v240 = vld [vmem:[#allocation8 + $0x1e0] sm:$0xff]
    %v241 = vld [vmem:[#allocation8 + $0x1e8] sm:$0xff]
    %v242 = vld [vmem:[#allocation8 + $0x1f0] sm:$0xff]
    %v243 = vld [vmem:[#allocation8 + $0x1f8] sm:$0xff]
    %v244 = vld [vmem:[#allocation8 + $0x200] sm:$0xff]
    %v245 = vld [vmem:[#allocation8 + $0x208] sm:$0xff]
    %v246 = vld [vmem:[#allocation8 + $0x210] sm:$0xff]
    %v247 = vld [vmem:[#allocation8 + $0x218] sm:$0xff]
    %v248 = vld [vmem:[#allocation8 + $0x220] sm:$0xff]
    %v249 = vld [vmem:[#allocation8 + $0x228] sm:$0xff]
    %v250 = vld [vmem:[#allocation8 + $0x230] sm:$0xff]
    %v251 = vld [vmem:[#allocation8 + $0x238] sm:$0xff]
    %v252 = vld [vmem:[#allocation8 + $0x240] sm:$0xff]
    %v253 = vld [vmem:[#allocation8 + $0x248] sm:$0xff]
    %v254 = vld [vmem:[#allocation8 + $0x250] sm:$0xff]
    %v255 = vld [vmem:[#allocation8 + $0x258] sm:$0xff]
    %v256 = vld [vmem:[#allocation8 + $0x260] sm:$0xff]
    %v257 = vld [vmem:[#allocation8 + $0x268] sm:$0xff]
    %v258 = vld [vmem:[#allocation8 + $0x270] sm:$0xff]
    %v259 = vld [vmem:[#allocation8 + $0x278] sm:$0xff]
    %v260 = vld [vmem:[#allocation8 + $0x280] sm:$0xff]
    %v261 = vld [vmem:[#allocation8 + $0x288] sm:$0xff]
    %v262 = vld [vmem:[#allocation8 + $0x290] sm:$0xff]
    %v263 = vld [vmem:[#allocation8 + $0x298] sm:$0xff]
    %v264 = vld [vmem:[#allocation8 + $0x2a0] sm:$0xff]
    %v265 = vld [vmem:[#allocation8 + $0x2a8] sm:$0xff]
    %v266 = vld [vmem:[#allocation8 + $0x2b0] sm:$0xff]
    %v267 = vld [vmem:[#allocation8 + $0x2b8] sm:$0xff]
    %v268 = vld [vmem:[#allocation8 + $0x2c0] sm:$0xff]
    %v269 = vld [vmem:[#allocation8 + $0x2c8] sm:$0xff]
    %v270 = vld [vmem:[#allocation8 + $0x2d0] sm:$0xff]
    %v271 = vld [vmem:[#allocation8 + $0x2d8] sm:$0xff]
    %v272 = vld [vmem:[#allocation8 + $0x2e0] sm:$0xff]
    %v273 = vld [vmem:[#allocation8 + $0x2e8] sm:$0xff]
    %v274 = vld [vmem:[#allocation8 + $0x2f0] sm:$0xff]
    %v275 = vld [vmem:[#allocation8 + $0x2f8] sm:$0xff]
    %v276 = vld [vmem:[#allocation10] sm:$0x1]
    %v278 = vlaneseq
    %v279 = vshrl.u32 %v278, 7
    %v280 = vsub.s32 0, %v279
    %v281 = vrot.slane %v276, %v280
    %v285 = vcombine.high %v178, %v178
    %v287 = vunpack.c.l.s4 1983009808
    %v288 = vunpack.c.0.s8 %v287
    %v289 = vlaneseq
    %v290 = vshrl.u32 %v289, 7
    %v291 = vsub.s32 %v288, %v290
    %v292 = vrot.slane %v178, %v291
    %v294 = vunpack.c.l.s4 1983009808
    %v295 = vunpack.c.0.s8 %v294
    %v296 = vlaneseq
    %v297 = vshrl.u32 %v296, 7
    %v298 = vsub.s32 %v295, %v297
    %v299 = vrot.slane %v285, %v298
    %v300 = vcombine.high %v292, %v292
    %v301 = vcombine.high %v299, %v299
    %v303 = vunpack.c.l.s4 1983009808
    %v304 = vunpack.c.0.s8 %v303
    %v305 = vlaneseq
    %v306 = vshrl.u32 %v305, 7
    %v307 = vsub.s32 %v304, %v306
    %v308 = vrot.slane %v179, %v307
    %v309 = vcombine.high %v308, %v308
    %316 = vmatprep.subr.mxu0 0.0
    %317 = vmatpush1.msra.mxu0 %v180
    %318 = vmatprep.subr.mxu0 0.0
    %319 = vmatpush1.msra.mxu0 %v181
    %320 = vmatprep.subr.mxu0 0.0
    %321 = vmatpush1.msra.mxu0 %v182
    %322 = vmatprep.subr.mxu0 0.0
    %323 = vmatpush1.msra.mxu0 %v183
    %324 = vmatprep.subr.mxu0 0.0
    %325 = vmatpush1.msra.mxu0 %v184
    %326 = vmatprep.subr.mxu0 0.0
    %327 = vmatpush1.msra.mxu0 %v185
    %328 = vmatprep.subr.mxu0 0.0
    %329 = vmatpush1.msra.mxu0 %v186
    %330 = vmatprep.subr.mxu0 0.0
    %331 = vmatpush1.msra.mxu0 %v187
    %332 = vmatprep.subr.mxu0 0.0
    %333 = vmatpush1.msra.mxu0 %v188
    %334 = vmatprep.subr.mxu0 0.0
    %335 = vmatpush1.msra.mxu0 %v189
    %336 = vmatprep.subr.mxu0 0.0
    %337 = vmatpush1.msra.mxu0 %v190
    %338 = vmatprep.subr.mxu0 0.0
    %339 = vmatpush1.msra.mxu0 %v191
    %340 = vmatprep.subr.mxu0 0.0
    %341 = vmatpush1.msra.mxu0 %v192
    %342 = vmatprep.subr.mxu0 0.0
    %343 = vmatpush1.msra.mxu0 %v193
    %344 = vmatprep.subr.mxu0 0.0
    %345 = vmatpush1.msra.mxu0 %v194
    %346 = vmatprep.subr.mxu0 0.0
    %347 = vmatpush1.msra.mxu0 %v195
    %348 = vmatprep.subr.mxu0 0.0
    %349 = vmatpush1.msra.mxu0 %v196
    %350 = vmatprep.subr.mxu0 0.0
    %351 = vmatpush1.msra.mxu0 %v197
    %352 = vmatprep.subr.mxu0 0.0
    %353 = vmatpush1.msra.mxu0 %v198
    %354 = vmatprep.subr.mxu0 0.0
    %355 = vmatpush1.msra.mxu0 %v199
    %356 = vmatprep.subr.mxu0 0.0
    %357 = vmatpush1.msra.mxu0 %v200
    %358 = vmatprep.subr.mxu0 0.0
    %359 = vmatpush1.msra.mxu0 %v201
    %360 = vmatprep.subr.mxu0 0.0
    %361 = vmatpush1.msra.mxu0 %v202
    %362 = vmatprep.subr.mxu0 0.0
    %363 = vmatpush1.msra.mxu0 %v203
    %364 = vmatprep.subr.mxu0 0.0
    %365 = vmatpush1.msra.mxu0 %v204
    %366 = vmatprep.subr.mxu0 0.0
    %367 = vmatpush1.msra.mxu0 %v205
    %368 = vmatprep.subr.mxu0 0.0
    %369 = vmatpush1.msra.mxu0 %v206
    %370 = vmatprep.subr.mxu0 0.0
    %371 = vmatpush1.msra.mxu0 %v207
    %372 = vmatprep.subr.mxu0 0.0
    %373 = vmatpush1.msra.mxu0 %v208
    %374 = vmatprep.subr.mxu0 0.0
    %375 = vmatpush1.msra.mxu0 %v209
    %376 = vmatprep.subr.mxu0 0.0
    %377 = vmatpush1.msra.mxu0 %v210
    %378 = vmatprep.subr.mxu0 0.0
    %379 = vmatpush1.msra.mxu0 %v211
    %380 = vmatprep.mubr.f32.mxu0 %v300
    %381 = vmatmul.mubr.f32.gmra.mrb[0].mxu0 %v292
    %v382 = vpop.f32.mrb[0].mxu0
    %v383 = vadd.f32 %v281, %v382
    %v384 = vpop.f32.mrb[0].mxu0
    %385 = vdwg.mxu0
    %386 = vmatprep.subr.mxu0 0.0
    %387 = vmatpush1.msra.mxu0 %v212
    %388 = vmatprep.subr.mxu0 0.0
    %389 = vmatpush1.msra.mxu0 %v213
    %390 = vmatprep.subr.mxu0 0.0
    %391 = vmatpush1.msra.mxu0 %v214
    %392 = vmatprep.subr.mxu0 0.0
    %393 = vmatpush1.msra.mxu0 %v215
    %394 = vmatprep.subr.mxu0 0.0
    %395 = vmatpush1.msra.mxu0 %v216
    %396 = vmatprep.subr.mxu0 0.0
    %397 = vmatpush1.msra.mxu0 %v217
    %398 = vmatprep.subr.mxu0 0.0
    %399 = vmatpush1.msra.mxu0 %v218
    %400 = vmatprep.subr.mxu0 0.0
    %401 = vmatpush1.msra.mxu0 %v219
    %402 = vmatprep.subr.mxu0 0.0
    %403 = vmatpush1.msra.mxu0 %v220
    %404 = vmatprep.subr.mxu0 0.0
    %405 = vmatpush1.msra.mxu0 %v221
    %406 = vmatprep.subr.mxu0 0.0
    %407 = vmatpush1.msra.mxu0 %v222
    %408 = vmatprep.subr.mxu0 0.0
    %409 = vmatpush1.msra.mxu0 %v223
    %410 = vmatprep.subr.mxu0 0.0
    %411 = vmatpush1.msra.mxu0 %v224
    %412 = vmatprep.subr.mxu0 0.0
    %413 = vmatpush1.msra.mxu0 %v225
    %414 = vmatprep.subr.mxu0 0.0
    %415 = vmatpush1.msra.mxu0 %v226
    %416 = vmatprep.subr.mxu0 0.0
    %417 = vmatpush1.msra.mxu0 %v227
    %418 = vmatprep.subr.mxu0 0.0
    %419 = vmatpush1.msra.mxu0 %v228
    %420 = vmatprep.subr.mxu0 0.0
    %421 = vmatpush1.msra.mxu0 %v229
    %422 = vmatprep.subr.mxu0 0.0
    %423 = vmatpush1.msra.mxu0 %v230
    %424 = vmatprep.subr.mxu0 0.0
    %425 = vmatpush1.msra.mxu0 %v231
    %426 = vmatprep.subr.mxu0 0.0
    %427 = vmatpush1.msra.mxu0 %v232
    %428 = vmatprep.subr.mxu0 0.0
    %429 = vmatpush1.msra.mxu0 %v233
    %430 = vmatprep.subr.mxu0 0.0
    %431 = vmatpush1.msra.mxu0 %v234
    %432 = vmatprep.subr.mxu0 0.0
    %433 = vmatpush1.msra.mxu0 %v235
    %434 = vmatprep.subr.mxu0 0.0
    %435 = vmatpush1.msra.mxu0 %v236
    %436 = vmatprep.subr.mxu0 0.0
    %437 = vmatpush1.msra.mxu0 %v237
    %438 = vmatprep.subr.mxu0 0.0
    %439 = vmatpush1.msra.mxu0 %v238
    %440 = vmatprep.subr.mxu0 0.0
    %441 = vmatpush1.msra.mxu0 %v239
    %442 = vmatprep.subr.mxu0 0.0
    %443 = vmatpush1.msra.mxu0 %v240
    %444 = vmatprep.subr.mxu0 0.0
    %445 = vmatpush1.msra.mxu0 %v241
    %446 = vmatprep.subr.mxu0 0.0
    %447 = vmatpush1.msra.mxu0 %v242
    %448 = vmatprep.subr.mxu0 0.0
    %449 = vmatpush1.msra.mxu0 %v243
    %450 = vmatprep.mubr.f32.mxu0 %v301
    %451 = vmatmul.mubr.f32.gmra.mrb[0].mxu0 %v299
    %v452 = vpop.f32.mrb[0].mxu0
    %v453 = vadd.f32 %v383, %v452
    %v454 = vpop.f32.mrb[0].mxu0
    %455 = vdwg.mxu0
    %456 = vmatprep.subr.mxu0 0.0
    %457 = vmatpush1.msra.mxu0 %v244
    %458 = vmatprep.subr.mxu0 0.0
    %459 = vmatpush1.msra.mxu0 %v245
    %460 = vmatprep.subr.mxu0 0.0
    %461 = vmatpush1.msra.mxu0 %v246
    %462 = vmatprep.subr.mxu0 0.0
    %463 = vmatpush1.msra.mxu0 %v247
    %464 = vmatprep.subr.mxu0 0.0
    %465 = vmatpush1.msra.mxu0 %v248
    %466 = vmatprep.subr.mxu0 0.0
    %467 = vmatpush1.msra.mxu0 %v249
    %468 = vmatprep.subr.mxu0 0.0
    %469 = vmatpush1.msra.mxu0 %v250
    %470 = vmatprep.subr.mxu0 0.0
    %471 = vmatpush1.msra.mxu0 %v251
    %472 = vmatprep.subr.mxu0 0.0
    %473 = vmatpush1.msra.mxu0 %v252
    %474 = vmatprep.subr.mxu0 0.0
    %475 = vmatpush1.msra.mxu0 %v253
    %476 = vmatprep.subr.mxu0 0.0
    %477 = vmatpush1.msra.mxu0 %v254
    %478 = vmatprep.subr.mxu0 0.0
    %479 = vmatpush1.msra.mxu0 %v255
    %480 = vmatprep.subr.mxu0 0.0
    %481 = vmatpush1.msra.mxu0 %v256
    %482 = vmatprep.subr.mxu0 0.0
    %483 = vmatpush1.msra.mxu0 %v257
    %484 = vmatprep.subr.mxu0 0.0
    %485 = vmatpush1.msra.mxu0 %v258
    %486 = vmatprep.subr.mxu0 0.0
    %487 = vmatpush1.msra.mxu0 %v259
    %488 = vmatprep.subr.mxu0 0.0
    %489 = vmatpush1.msra.mxu0 %v260
    %490 = vmatprep.subr.mxu0 0.0
    %491 = vmatpush1.msra.mxu0 %v261
    %492 = vmatprep.subr.mxu0 0.0
    %493 = vmatpush1.msra.mxu0 %v262
    %494 = vmatprep.subr.mxu0 0.0
    %495 = vmatpush1.msra.mxu0 %v263
    %496 = vmatprep.subr.mxu0 0.0
    %497 = vmatpush1.msra.mxu0 %v264
    %498 = vmatprep.subr.mxu0 0.0
    %499 = vmatpush1.msra.mxu0 %v265
    %500 = vmatprep.subr.mxu0 0.0
    %501 = vmatpush1.msra.mxu0 %v266
    %502 = vmatprep.subr.mxu0 0.0
    %503 = vmatpush1.msra.mxu0 %v267
    %504 = vmatprep.subr.mxu0 0.0
    %505 = vmatpush1.msra.mxu0 %v268
    %506 = vmatprep.subr.mxu0 0.0
    %507 = vmatpush1.msra.mxu0 %v269
    %508 = vmatprep.subr.mxu0 0.0
    %509 = vmatpush1.msra.mxu0 %v270
    %510 = vmatprep.subr.mxu0 0.0
    %511 = vmatpush1.msra.mxu0 %v271
    %512 = vmatprep.subr.mxu0 0.0
    %513 = vmatpush1.msra.mxu0 %v272
    %514 = vmatprep.subr.mxu0 0.0
    %515 = vmatpush1.msra.mxu0 %v273
    %516 = vmatprep.subr.mxu0 0.0
    %517 = vmatpush1.msra.mxu0 %v274
    %518 = vmatprep.subr.mxu0 0.0
    %519 = vmatpush1.msra.mxu0 %v275
    %520 = vmatprep.mubr.f32.mxu0 %v309
    %521 = vmatmul.mubr.f32.gmra.mrb[0].mxu0 %v308
    %v522 = vpop.f32.mrb[0].mxu0
    %v523 = vadd.f32 %v453, %v522
    %v524 = vpop.f32.mrb[0].mxu0
    %525 = vdwg.mxu0
    %v526 = vld [vmem:[#allocation5] sm:$0x3f]
    %v527 = vld [vmem:[#allocation11] sm:$0xff]
    %v528 = vld [vmem:[#allocation11 + $0x8] sm:$0xff]
    %v529 = vld [vmem:[#allocation11 + $0x10] sm:$0xff]
    %v530 = vld [vmem:[#allocation11 + $0x18] sm:$0xff]
    %v531 = vld [vmem:[#allocation11 + $0x20] sm:$0xff]
    %v532 = vld [vmem:[#allocation11 + $0x28] sm:$0xff]
    %v533 = vld [vmem:[#allocation11 + $0x30] sm:$0xff]
    %v534 = vld [vmem:[#allocation11 + $0x38] sm:$0xff]
    %v535 = vld [vmem:[#allocation11 + $0x40] sm:$0xff]
    %v536 = vld [vmem:[#allocation11 + $0x48] sm:$0xff]
    %v537 = vld [vmem:[#allocation11 + $0x50] sm:$0xff]
    %v538 = vld [vmem:[#allocation11 + $0x58] sm:$0xff]
    %v539 = vld [vmem:[#allocation11 + $0x60] sm:$0xff]
    %v540 = vld [vmem:[#allocation11 + $0x68] sm:$0xff]
    %v541 = vld [vmem:[#allocation11 + $0x70] sm:$0xff]
    %v542 = vld [vmem:[#allocation11 + $0x78] sm:$0xff]
    %v543 = vld [vmem:[#allocation11 + $0x80] sm:$0xff]
    %v544 = vld [vmem:[#allocation11 + $0x88] sm:$0xff]
    %v545 = vld [vmem:[#allocation11 + $0x90] sm:$0xff]
    %v546 = vld [vmem:[#allocation11 + $0x98] sm:$0xff]
    %v547 = vld [vmem:[#allocation11 + $0xa0] sm:$0xff]
    %v548 = vld [vmem:[#allocation11 + $0xa8] sm:$0xff]
    %v549 = vld [vmem:[#allocation11 + $0xb0] sm:$0xff]
    %v550 = vld [vmem:[#allocation11 + $0xb8] sm:$0xff]
    %v551 = vld [vmem:[#allocation11 + $0xc0] sm:$0xff]
    %v552 = vld [vmem:[#allocation11 + $0xc8] sm:$0xff]
    %v553 = vld [vmem:[#allocation11 + $0xd0] sm:$0xff]
    %v554 = vld [vmem:[#allocation11 + $0xd8] sm:$0xff]
    %v555 = vld [vmem:[#allocation11 + $0xe0] sm:$0xff]
    %v556 = vld [vmem:[#allocation11 + $0xe8] sm:$0xff]
    %v557 = vld [vmem:[#allocation11 + $0xf0] sm:$0xff]
    %v558 = vld [vmem:[#allocation11 + $0xf8] sm:$0xff]
    %v559 = vld [vmem:[#allocation11 + $0x100] sm:$0xff]
    %v560 = vld [vmem:[#allocation11 + $0x108] sm:$0xff]
    %v561 = vld [vmem:[#allocation11 + $0x110] sm:$0xff]
    %v562 = vld [vmem:[#allocation11 + $0x118] sm:$0xff]
    %v563 = vld [vmem:[#allocation11 + $0x120] sm:$0xff]
    %v564 = vld [vmem:[#allocation11 + $0x128] sm:$0xff]
    %v565 = vld [vmem:[#allocation11 + $0x130] sm:$0xff]
    %v566 = vld [vmem:[#allocation11 + $0x138] sm:$0xff]
    %v567 = vld [vmem:[#allocation11 + $0x140] sm:$0xff]
    %v568 = vld [vmem:[#allocation11 + $0x148] sm:$0xff]
    %v569 = vld [vmem:[#allocation11 + $0x150] sm:$0xff]
    %v570 = vld [vmem:[#allocation11 + $0x158] sm:$0xff]
    %v571 = vld [vmem:[#allocation11 + $0x160] sm:$0xff]
    %v572 = vld [vmem:[#allocation11 + $0x168] sm:$0xff]
    %v573 = vld [vmem:[#allocation11 + $0x170] sm:$0xff]
    %v574 = vld [vmem:[#allocation11 + $0x178] sm:$0xff]
    %v575 = vld [vmem:[#allocation11 + $0x180] sm:$0xff]
    %v576 = vld [vmem:[#allocation11 + $0x188] sm:$0xff]
    %v577 = vld [vmem:[#allocation11 + $0x190] sm:$0xff]
    %v578 = vld [vmem:[#allocation11 + $0x198] sm:$0xff]
    %v579 = vld [vmem:[#allocation11 + $0x1a0] sm:$0xff]
    %v580 = vld [vmem:[#allocation11 + $0x1a8] sm:$0xff]
    %v581 = vld [vmem:[#allocation11 + $0x1b0] sm:$0xff]
    %v582 = vld [vmem:[#allocation11 + $0x1b8] sm:$0xff]
    %v583 = vld [vmem:[#allocation11 + $0x1c0] sm:$0xff]
    %v584 = vld [vmem:[#allocation11 + $0x1c8] sm:$0xff]
    %v585 = vld [vmem:[#allocation11 + $0x1d0] sm:$0xff]
    %v586 = vld [vmem:[#allocation11 + $0x1d8] sm:$0xff]
    %v587 = vld [vmem:[#allocation11 + $0x1e0] sm:$0xff]
    %v588 = vld [vmem:[#allocation11 + $0x1e8] sm:$0xff]
    %v589 = vld [vmem:[#allocation11 + $0x1f0] sm:$0xff]
    %v590 = vld [vmem:[#allocation11 + $0x1f8] sm:$0xff]
    %v591 = vld [vmem:[#allocation11 + $0x200] sm:$0xff]
    %v592 = vld [vmem:[#allocation11 + $0x208] sm:$0xff]
    %v593 = vld [vmem:[#allocation11 + $0x210] sm:$0xff]
    %v594 = vld [vmem:[#allocation11 + $0x218] sm:$0xff]
    %v595 = vld [vmem:[#allocation11 + $0x220] sm:$0xff]
    %v596 = vld [vmem:[#allocation11 + $0x228] sm:$0xff]
    %v597 = vld [vmem:[#allocation11 + $0x230] sm:$0xff]
    %v598 = vld [vmem:[#allocation11 + $0x238] sm:$0xff]
    %v599 = vld [vmem:[#allocation11 + $0x240] sm:$0xff]
    %v600 = vld [vmem:[#allocation11 + $0x248] sm:$0xff]
    %v601 = vld [vmem:[#allocation11 + $0x250] sm:$0xff]
    %v602 = vld [vmem:[#allocation11 + $0x258] sm:$0xff]
    %v603 = vld [vmem:[#allocation11 + $0x260] sm:$0xff]
    %v604 = vld [vmem:[#allocation11 + $0x268] sm:$0xff]
    %v605 = vld [vmem:[#allocation11 + $0x270] sm:$0xff]
    %v606 = vld [vmem:[#allocation11 + $0x278] sm:$0xff]
    %v607 = vld [vmem:[#allocation11 + $0x280] sm:$0xff]
    %v608 = vld [vmem:[#allocation11 + $0x288] sm:$0xff]
    %v609 = vld [vmem:[#allocation11 + $0x290] sm:$0xff]
    %v610 = vld [vmem:[#allocation11 + $0x298] sm:$0xff]
    %v611 = vld [vmem:[#allocation11 + $0x2a0] sm:$0xff]
    %v612 = vld [vmem:[#allocation11 + $0x2a8] sm:$0xff]
    %v613 = vld [vmem:[#allocation11 + $0x2b0] sm:$0xff]
    %v614 = vld [vmem:[#allocation11 + $0x2b8] sm:$0xff]
    %v615 = vld [vmem:[#allocation11 + $0x2c0] sm:$0xff]
    %v616 = vld [vmem:[#allocation11 + $0x2c8] sm:$0xff]
    %v617 = vld [vmem:[#allocation11 + $0x2d0] sm:$0xff]
    %v618 = vld [vmem:[#allocation11 + $0x2d8] sm:$0xff]
    %v619 = vld [vmem:[#allocation11 + $0x2e0] sm:$0xff]
    %v620 = vld [vmem:[#allocation11 + $0x2e8] sm:$0xff]
    %v621 = vld [vmem:[#allocation11 + $0x2f0] sm:$0xff]
    %v622 = vld [vmem:[#allocation11 + $0x2f8] sm:$0xff]
    %v623 = vld [vmem:[#allocation11 + $0x300] sm:$0xff]
    %v624 = vld [vmem:[#allocation11 + $0x308] sm:$0xff]
    %v625 = vld [vmem:[#allocation11 + $0x310] sm:$0xff]
    %v626 = vld [vmem:[#allocation11 + $0x318] sm:$0xff]
    %v627 = vld [vmem:[#allocation11 + $0x320] sm:$0xff]
    %v628 = vld [vmem:[#allocation11 + $0x328] sm:$0xff]
    %v629 = vld [vmem:[#allocation11 + $0x330] sm:$0xff]
    %v630 = vld [vmem:[#allocation11 + $0x338] sm:$0xff]
    %v631 = vld [vmem:[#allocation11 + $0x340] sm:$0xff]
    %v632 = vld [vmem:[#allocation11 + $0x348] sm:$0xff]
    %v633 = vld [vmem:[#allocation11 + $0x350] sm:$0xff]
    %v634 = vld [vmem:[#allocation11 + $0x358] sm:$0xff]
    %v635 = vld [vmem:[#allocation11 + $0x360] sm:$0xff]
    %v636 = vld [vmem:[#allocation11 + $0x368] sm:$0xff]
    %v637 = vld [vmem:[#allocation11 + $0x370] sm:$0xff]
    %v638 = vld [vmem:[#allocation11 + $0x378] sm:$0xff]
    %v639 = vld [vmem:[#allocation11 + $0x380] sm:$0xff]
    %v640 = vld [vmem:[#allocation11 + $0x388] sm:$0xff]
    %v641 = vld [vmem:[#allocation11 + $0x390] sm:$0xff]
    %v642 = vld [vmem:[#allocation11 + $0x398] sm:$0xff]
    %v643 = vld [vmem:[#allocation11 + $0x3a0] sm:$0xff]
    %v644 = vld [vmem:[#allocation11 + $0x3a8] sm:$0xff]
    %v645 = vld [vmem:[#allocation11 + $0x3b0] sm:$0xff]
    %v646 = vld [vmem:[#allocation11 + $0x3b8] sm:$0xff]
    %v647 = vld [vmem:[#allocation11 + $0x3c0] sm:$0xff]
    %v648 = vld [vmem:[#allocation11 + $0x3c8] sm:$0xff]
    %v649 = vld [vmem:[#allocation11 + $0x3d0] sm:$0xff]
    %v650 = vld [vmem:[#allocation11 + $0x3d8] sm:$0xff]
    %v651 = vld [vmem:[#allocation11 + $0x3e0] sm:$0xff]
    %v652 = vld [vmem:[#allocation11 + $0x3e8] sm:$0xff]
    %v653 = vld [vmem:[#allocation11 + $0x3f0] sm:$0xff]
    %v654 = vld [vmem:[#allocation11 + $0x3f8] sm:$0xff]
    %v655 = vld [vmem:[#allocation11 + $0x400] sm:$0xff]
    %v656 = vld [vmem:[#allocation11 + $0x408] sm:$0xff]
    %v657 = vld [vmem:[#allocation11 + $0x410] sm:$0xff]
    %v658 = vld [vmem:[#allocation11 + $0x418] sm:$0xff]
    %v659 = vld [vmem:[#allocation11 + $0x420] sm:$0xff]
    %v660 = vld [vmem:[#allocation11 + $0x428] sm:$0xff]
    %v661 = vld [vmem:[#allocation11 + $0x430] sm:$0xff]
    %v662 = vld [vmem:[#allocation11 + $0x438] sm:$0xff]
    %v663 = vld [vmem:[#allocation11 + $0x440] sm:$0xff]
    %v664 = vld [vmem:[#allocation11 + $0x448] sm:$0xff]
    %v665 = vld [vmem:[#allocation11 + $0x450] sm:$0xff]
    %v666 = vld [vmem:[#allocation11 + $0x458] sm:$0xff]
    %v667 = vld [vmem:[#allocation11 + $0x460] sm:$0xff]
    %v668 = vld [vmem:[#allocation11 + $0x468] sm:$0xff]
    %v669 = vld [vmem:[#allocation11 + $0x470] sm:$0xff]
    %v670 = vld [vmem:[#allocation11 + $0x478] sm:$0xff]
    %v671 = vld [vmem:[#allocation11 + $0x480] sm:$0xff]
    %v672 = vld [vmem:[#allocation11 + $0x488] sm:$0xff]
    %v673 = vld [vmem:[#allocation11 + $0x490] sm:$0xff]
    %v674 = vld [vmem:[#allocation11 + $0x498] sm:$0xff]
    %v675 = vld [vmem:[#allocation11 + $0x4a0] sm:$0xff]
    %v676 = vld [vmem:[#allocation11 + $0x4a8] sm:$0xff]
    %v677 = vld [vmem:[#allocation11 + $0x4b0] sm:$0xff]
    %v678 = vld [vmem:[#allocation11 + $0x4b8] sm:$0xff]
    %v679 = vld [vmem:[#allocation11 + $0x4c0] sm:$0xff]
    %v680 = vld [vmem:[#allocation11 + $0x4c8] sm:$0xff]
    %v681 = vld [vmem:[#allocation11 + $0x4d0] sm:$0xff]
    %v682 = vld [vmem:[#allocation11 + $0x4d8] sm:$0xff]
    %v683 = vld [vmem:[#allocation11 + $0x4e0] sm:$0xff]
    %v684 = vld [vmem:[#allocation11 + $0x4e8] sm:$0xff]
    %v685 = vld [vmem:[#allocation11 + $0x4f0] sm:$0xff]
    %v686 = vld [vmem:[#allocation11 + $0x4f8] sm:$0xff]
    %v687 = vld [vmem:[#allocation11 + $0x500] sm:$0xff]
    %v688 = vld [vmem:[#allocation11 + $0x508] sm:$0xff]
    %v689 = vld [vmem:[#allocation11 + $0x510] sm:$0xff]
    %v690 = vld [vmem:[#allocation11 + $0x518] sm:$0xff]
    %v691 = vld [vmem:[#allocation11 + $0x520] sm:$0xff]
    %v692 = vld [vmem:[#allocation11 + $0x528] sm:$0xff]
    %v693 = vld [vmem:[#allocation11 + $0x530] sm:$0xff]
    %v694 = vld [vmem:[#allocation11 + $0x538] sm:$0xff]
    %v695 = vld [vmem:[#allocation11 + $0x540] sm:$0xff]
    %v696 = vld [vmem:[#allocation11 + $0x548] sm:$0xff]
    %v697 = vld [vmem:[#allocation11 + $0x550] sm:$0xff]
    %v698 = vld [vmem:[#allocation11 + $0x558] sm:$0xff]
    %v699 = vld [vmem:[#allocation11 + $0x560] sm:$0xff]
    %v700 = vld [vmem:[#allocation11 + $0x568] sm:$0xff]
    %v701 = vld [vmem:[#allocation11 + $0x570] sm:$0xff]
    %v702 = vld [vmem:[#allocation11 + $0x578] sm:$0xff]
    %v703 = vld [vmem:[#allocation11 + $0x580] sm:$0xff]
    %v704 = vld [vmem:[#allocation11 + $0x588] sm:$0xff]
    %v705 = vld [vmem:[#allocation11 + $0x590] sm:$0xff]
    %v706 = vld [vmem:[#allocation11 + $0x598] sm:$0xff]
    %v707 = vld [vmem:[#allocation11 + $0x5a0] sm:$0xff]
    %v708 = vld [vmem:[#allocation11 + $0x5a8] sm:$0xff]
    %v709 = vld [vmem:[#allocation11 + $0x5b0] sm:$0xff]
    %v710 = vld [vmem:[#allocation11 + $0x5b8] sm:$0xff]
    %v711 = vld [vmem:[#allocation11 + $0x5c0] sm:$0xff]
    %v712 = vld [vmem:[#allocation11 + $0x5c8] sm:$0xff]
    %v713 = vld [vmem:[#allocation11 + $0x5d0] sm:$0xff]
    %v714 = vld [vmem:[#allocation11 + $0x5d8] sm:$0xff]
    %v715 = vld [vmem:[#allocation11 + $0x5e0] sm:$0xff]
    %v716 = vld [vmem:[#allocation11 + $0x5e8] sm:$0xff]
    %v717 = vld [vmem:[#allocation11 + $0x5f0] sm:$0xff]
    %v718 = vld [vmem:[#allocation11 + $0x5f8] sm:$0xff]
    %v720 = vcombine.high %v526, %v526
    %v722 = vunpack.c.l.s4 1983009808
    %v723 = vunpack.c.0.s8 %v722
    %v724 = vlaneseq
    %v725 = vshrl.u32 %v724, 7
    %v726 = vsub.s32 %v723, %v725
    %v727 = vrot.slane %v526, %v726
    %v729 = vunpack.c.l.s4 1983009808
    %v730 = vunpack.c.0.s8 %v729
    %v731 = vlaneseq
    %v732 = vshrl.u32 %v731, 7
    %v733 = vsub.s32 %v730, %v732
    %v734 = vrot.slane %v720, %v733
    %v735 = vcombine.high %v727, %v727
    %739 = vmatprep.subr.mxu0 %v528
    %740 = vmatpush1.msra.mxu0 %v527
    %741 = vmatprep.subr.mxu0 %v532
    %742 = vmatpush1.msra.mxu0 %v531
    %743 = vmatprep.subr.mxu0 %v536
    %744 = vmatpush1.msra.mxu0 %v535
    %745 = vmatprep.subr.mxu0 %v540
    %746 = vmatpush1.msra.mxu0 %v539
    %747 = vmatprep.subr.mxu0 %v544
    %748 = vmatpush1.msra.mxu0 %v543
    %749 = vmatprep.subr.mxu0 %v548
    %750 = vmatpush1.msra.mxu0 %v547
    %751 = vmatprep.subr.mxu0 %v552
    %752 = vmatpush1.msra.mxu0 %v551
    %753 = vmatprep.subr.mxu0 %v556
    %754 = vmatpush1.msra.mxu0 %v555
    %755 = vmatprep.subr.mxu0 %v560
    %756 = vmatpush1.msra.mxu0 %v559
    %757 = vmatprep.subr.mxu0 %v564
    %758 = vmatpush1.msra.mxu0 %v563
    %759 = vmatprep.subr.mxu0 %v568
    %760 = vmatpush1.msra.mxu0 %v567
    %761 = vmatprep.subr.mxu0 %v572
    %762 = vmatpush1.msra.mxu0 %v571
    %763 = vmatprep.subr.mxu0 %v576
    %764 = vmatpush1.msra.mxu0 %v575
    %765 = vmatprep.subr.mxu0 %v580
    %766 = vmatpush1.msra.mxu0 %v579
    %767 = vmatprep.subr.mxu0 %v584
    %768 = vmatpush1.msra.mxu0 %v583
    %769 = vmatprep.subr.mxu0 %v588
    %770 = vmatpush1.msra.mxu0 %v587
    %771 = vmatprep.subr.mxu0 %v592
    %772 = vmatpush1.msra.mxu0 %v591
    %773 = vmatprep.subr.mxu0 %v596
    %774 = vmatpush1.msra.mxu0 %v595
    %775 = vmatprep.subr.mxu0 %v600
    %776 = vmatpush1.msra.mxu0 %v599
    %777 = vmatprep.subr.mxu0 %v604
    %778 = vmatpush1.msra.mxu0 %v603
    %779 = vmatprep.subr.mxu0 %v608
    %780 = vmatpush1.msra.mxu0 %v607
    %781 = vmatprep.subr.mxu0 %v612
    %782 = vmatpush1.msra.mxu0 %v611
    %783 = vmatprep.subr.mxu0 %v616
    %784 = vmatpush1.msra.mxu0 %v615
    %785 = vmatprep.subr.mxu0 %v620
    %786 = vmatpush1.msra.mxu0 %v619
    %787 = vmatprep.subr.mxu0 %v624
    %788 = vmatpush1.msra.mxu0 %v623
    %789 = vmatprep.subr.mxu0 %v628
    %790 = vmatpush1.msra.mxu0 %v627
    %791 = vmatprep.subr.mxu0 %v632
    %792 = vmatpush1.msra.mxu0 %v631
    %793 = vmatprep.subr.mxu0 %v636
    %794 = vmatpush1.msra.mxu0 %v635
    %795 = vmatprep.subr.mxu0 %v640
    %796 = vmatpush1.msra.mxu0 %v639
    %797 = vmatprep.subr.mxu0 %v644
    %798 = vmatpush1.msra.mxu0 %v643
    %799 = vmatprep.subr.mxu0 %v648
    %800 = vmatpush1.msra.mxu0 %v647
    %801 = vmatprep.subr.mxu0 %v652
    %802 = vmatpush1.msra.mxu0 %v651
    %803 = vmatprep.mubr.f32.mxu0 %v735
    %804 = vmatmul.mubr.f32.gmra.mrb[0].mxu0 %v727
    %v805 = vpop.f32.mrb[0].mxu0
    %v806 = vadd.f32 0.0, %v805
    %v807 = vpop.f32.mrb[0].mxu0
    %v808 = vadd.f32 0.0, %v807
    %809 = vdwg.mxu0
    %810 = vmatprep.subr.mxu0 %v656
    %811 = vmatpush1.msra.mxu0 %v655
    %812 = vmatprep.subr.mxu0 %v660
    %813 = vmatpush1.msra.mxu0 %v659
    %814 = vmatprep.subr.mxu0 %v664
    %815 = vmatpush1.msra.mxu0 %v663
    %816 = vmatprep.subr.mxu0 %v668
    %817 = vmatpush1.msra.mxu0 %v667
    %818 = vmatprep.subr.mxu0 %v672
    %819 = vmatpush1.msra.mxu0 %v671
    %820 = vmatprep.subr.mxu0 %v676
    %821 = vmatpush1.msra.mxu0 %v675
    %822 = vmatprep.subr.mxu0 %v680
    %823 = vmatpush1.msra.mxu0 %v679
    %824 = vmatprep.subr.mxu0 %v684
    %825 = vmatpush1.msra.mxu0 %v683
    %826 = vmatprep.subr.mxu0 %v688
    %827 = vmatpush1.msra.mxu0 %v687
    %828 = vmatprep.subr.mxu0 %v692
    %829 = vmatpush1.msra.mxu0 %v691
    %830 = vmatprep.subr.mxu0 %v696
    %831 = vmatpush1.msra.mxu0 %v695
    %832 = vmatprep.subr.mxu0 %v700
    %833 = vmatpush1.msra.mxu0 %v699
    %834 = vmatprep.subr.mxu0 %v704
    %835 = vmatpush1.msra.mxu0 %v703
    %836 = vmatprep.subr.mxu0 %v708
    %837 = vmatpush1.msra.mxu0 %v707
    %838 = vmatprep.subr.mxu0 %v712
    %839 = vmatpush1.msra.mxu0 %v711
    %840 = vmatprep.subr.mxu0 %v716
    %841 = vmatpush1.msra.mxu0 %v715
    %842 = vmatprep.subr.mxu0 0.0
    %843 = vmatpush1.msra.mxu0 0.0
    %844 = vmatprep.subr.mxu0 0.0
    %845 = vmatpush1.msra.mxu0 0.0
    %846 = vmatprep.subr.mxu0 0.0
    %847 = vmatpush1.msra.mxu0 0.0
    %848 = vmatprep.subr.mxu0 0.0
    %849 = vmatpush1.msra.mxu0 0.0
    %850 = vmatprep.subr.mxu0 0.0
    %851 = vmatpush1.msra.mxu0 0.0
    %852 = vmatprep.subr.mxu0 0.0
    %853 = vmatpush1.msra.mxu0 0.0
    %854 = vmatprep.subr.mxu0 0.0
    %855 = vmatpush1.msra.mxu0 0.0
    %856 = vmatprep.subr.mxu0 0.0
    %857 = vmatpush1.msra.mxu0 0.0
    %858 = vmatprep.subr.mxu0 0.0
    %859 = vmatpush1.msra.mxu0 0.0
    %860 = vmatprep.subr.mxu0 0.0
    %861 = vmatpush1.msra.mxu0 0.0
    %862 = vmatprep.subr.mxu0 0.0
    %863 = vmatpush1.msra.mxu0 0.0
    %864 = vmatprep.subr.mxu0 0.0
    %865 = vmatpush1.msra.mxu0 0.0
    %866 = vmatprep.subr.mxu0 0.0
    %867 = vmatpush1.msra.mxu0 0.0
    %868 = vmatprep.subr.mxu0 0.0
    %869 = vmatpush1.msra.mxu0 0.0
    %870 = vmatprep.subr.mxu0 0.0
    %871 = vmatpush1.msra.mxu0 0.0
    %872 = vmatprep.subr.mxu0 0.0
    %873 = vmatpush1.msra.mxu0 0.0
    %874 = vmatprep.mubr.f32.mxu0 0.0
    %875 = vmatmul.mubr.f32.gmra.mrb[0].mxu0 %v734
    %v876 = vpop.f32.mrb[0].mxu0
    %v877 = vadd.f32 %v806, %v876
    %v878 = vpop.f32.mrb[0].mxu0
    %v879 = vadd.f32 %v808, %v878
    %880 = vdwg.mxu0
    %881 = vmatprep.subr.mxu0 %v530
    %882 = vmatpush1.msra.mxu0 %v529
    %883 = vmatprep.subr.mxu0 %v534
    %884 = vmatpush1.msra.mxu0 %v533
    %885 = vmatprep.subr.mxu0 %v538
    %886 = vmatpush1.msra.mxu0 %v537
    %887 = vmatprep.subr.mxu0 %v542
    %888 = vmatpush1.msra.mxu0 %v541
    %889 = vmatprep.subr.mxu0 %v546
    %890 = vmatpush1.msra.mxu0 %v545
    %891 = vmatprep.subr.mxu0 %v550
    %892 = vmatpush1.msra.mxu0 %v549
    %893 = vmatprep.subr.mxu0 %v554
    %894 = vmatpush1.msra.mxu0 %v553
    %895 = vmatprep.subr.mxu0 %v558
    %896 = vmatpush1.msra.mxu0 %v557
    %897 = vmatprep.subr.mxu0 %v562
    %898 = vmatpush1.msra.mxu0 %v561
    %899 = vmatprep.subr.mxu0 %v566
    %900 = vmatpush1.msra.mxu0 %v565
    %901 = vmatprep.subr.mxu0 %v570
    %902 = vmatpush1.msra.mxu0 %v569
    %903 = vmatprep.subr.mxu0 %v574
    %904 = vmatpush1.msra.mxu0 %v573
    %905 = vmatprep.subr.mxu0 %v578
    %906 = vmatpush1.msra.mxu0 %v577
    %907 = vmatprep.subr.mxu0 %v582
    %908 = vmatpush1.msra.mxu0 %v581
    %909 = vmatprep.subr.mxu0 %v586
    %910 = vmatpush1.msra.mxu0 %v585
    %911 = vmatprep.subr.mxu0 %v590
    %912 = vmatpush1.msra.mxu0 %v589
    %913 = vmatprep.subr.mxu0 %v594
    %914 = vmatpush1.msra.mxu0 %v593
    %915 = vmatprep.subr.mxu0 %v598
    %916 = vmatpush1.msra.mxu0 %v597
    %917 = vmatprep.subr.mxu0 %v602
    %918 = vmatpush1.msra.mxu0 %v601
    %919 = vmatprep.subr.mxu0 %v606
    %920 = vmatpush1.msra.mxu0 %v605
    %921 = vmatprep.subr.mxu0 %v610
    %922 = vmatpush1.msra.mxu0 %v609
    %923 = vmatprep.subr.mxu0 %v614
    %924 = vmatpush1.msra.mxu0 %v613
    %925 = vmatprep.subr.mxu0 %v618
    %926 = vmatpush1.msra.mxu0 %v617
    %927 = vmatprep.subr.mxu0 %v622
    %928 = vmatpush1.msra.mxu0 %v621
    %929 = vmatprep.subr.mxu0 %v626
    %930 = vmatpush1.msra.mxu0 %v625
    %931 = vmatprep.subr.mxu0 %v630
    %932 = vmatpush1.msra.mxu0 %v629
    %933 = vmatprep.subr.mxu0 %v634
    %934 = vmatpush1.msra.mxu0 %v633
    %935 = vmatprep.subr.mxu0 %v638
    %936 = vmatpush1.msra.mxu0 %v637
    %937 = vmatprep.subr.mxu0 %v642
    %938 = vmatpush1.msra.mxu0 %v641
    %939 = vmatprep.subr.mxu0 %v646
    %940 = vmatpush1.msra.mxu0 %v645
    %941 = vmatprep.subr.mxu0 %v650
    %942 = vmatpush1.msra.mxu0 %v649
    %943 = vmatprep.subr.mxu0 %v654
    %944 = vmatpush1.msra.mxu0 %v653
    %945 = vmatprep.mubr.f32.mxu0 %v735
    %946 = vmatmul.mubr.f32.gmra.mrb[0].mxu0 %v727
    %v947 = vpop.f32.mrb[0].mxu0
    %v948 = vadd.f32 0.0, %v947
    %v949 = vpop.f32.mrb[0].mxu0
    %v950 = vadd.f32 0.0, %v949
    %951 = vdwg.mxu0
    %952 = vmatprep.subr.mxu0 %v658
    %953 = vmatpush1.msra.mxu0 %v657
    %954 = vmatprep.subr.mxu0 %v662
    %955 = vmatpush1.msra.mxu0 %v661
    %956 = vmatprep.subr.mxu0 %v666
    %957 = vmatpush1.msra.mxu0 %v665
    %958 = vmatprep.subr.mxu0 %v670
    %959 = vmatpush1.msra.mxu0 %v669
    %960 = vmatprep.subr.mxu0 %v674
    %961 = vmatpush1.msra.mxu0 %v673
    %962 = vmatprep.subr.mxu0 %v678
    %963 = vmatpush1.msra.mxu0 %v677
    %964 = vmatprep.subr.mxu0 %v682
    %965 = vmatpush1.msra.mxu0 %v681
    %966 = vmatprep.subr.mxu0 %v686
    %967 = vmatpush1.msra.mxu0 %v685
    %968 = vmatprep.subr.mxu0 %v690
    %969 = vmatpush1.msra.mxu0 %v689
    %970 = vmatprep.subr.mxu0 %v694
    %971 = vmatpush1.msra.mxu0 %v693
    %972 = vmatprep.subr.mxu0 %v698
    %973 = vmatpush1.msra.mxu0 %v697
    %974 = vmatprep.subr.mxu0 %v702
    %975 = vmatpush1.msra.mxu0 %v701
    %976 = vmatprep.subr.mxu0 %v706
    %977 = vmatpush1.msra.mxu0 %v705
    %978 = vmatprep.subr.mxu0 %v710
    %979 = vmatpush1.msra.mxu0 %v709
    %980 = vmatprep.subr.mxu0 %v714
    %981 = vmatpush1.msra.mxu0 %v713
    %982 = vmatprep.subr.mxu0 %v718
    %983 = vmatpush1.msra.mxu0 %v717
    %984 = vmatprep.subr.mxu0 0.0
    %985 = vmatpush1.msra.mxu0 0.0
    %986 = vmatprep.subr.mxu0 0.0
    %987 = vmatpush1.msra.mxu0 0.0
    %988 = vmatprep.subr.mxu0 0.0
    %989 = vmatpush1.msra.mxu0 0.0
    %990 = vmatprep.subr.mxu0 0.0
    %991 = vmatpush1.msra.mxu0 0.0
    %992 = vmatprep.subr.mxu0 0.0
    %993 = vmatpush1.msra.mxu0 0.0
    %994 = vmatprep.subr.mxu0 0.0
    %995 = vmatpush1.msra.mxu0 0.0
    %996 = vmatprep.subr.mxu0 0.0
    %997 = vmatpush1.msra.mxu0 0.0
    %998 = vmatprep.subr.mxu0 0.0
    %999 = vmatpush1.msra.mxu0 0.0
    %1000 = vmatprep.subr.mxu0 0.0
    %1001 = vmatpush1.msra.mxu0 0.0
    %1002 = vmatprep.subr.mxu0 0.0
    %1003 = vmatpush1.msra.mxu0 0.0
    %1004 = vmatprep.subr.mxu0 0.0
    %1005 = vmatpush1.msra.mxu0 0.0
    %1006 = vmatprep.subr.mxu0 0.0
    %1007 = vmatpush1.msra.mxu0 0.0
    %1008 = vmatprep.subr.mxu0 0.0
    %1009 = vmatpush1.msra.mxu0 0.0
    %1010 = vmatprep.subr.mxu0 0.0
    %1011 = vmatpush1.msra.mxu0 0.0
    %1012 = vmatprep.subr.mxu0 0.0
    %1013 = vmatpush1.msra.mxu0 0.0
    %1014 = vmatprep.subr.mxu0 0.0
    %1015 = vmatpush1.msra.mxu0 0.0
    %1016 = vmatprep.mubr.f32.mxu0 0.0
    %1017 = vmatmul.mubr.f32.gmra.mrb[0].mxu0 %v734
    %v1018 = vpop.f32.mrb[0].mxu0
    %v1019 = vadd.f32 %v948, %v1018
    %v1020 = vpop.f32.mrb[0].mxu0
    %v1021 = vadd.f32 %v950, %v1020
    %1022 = vdwg.mxu0
    %v1023 = vld [vmem:[#allocation13] sm:$0xf]
    %v1024 = vld [vmem:[#allocation14] sm:$0xf]
    %vm1025 = vcmask 1041408
    %v1026 = vsel %vm1025, %v877, 0.0
    %v1027 = vrot.slane %v1026, 4
    %v1028 = vadd.f32 %v1026, %v1027
    %v1029 = vrot.slane %v1028, 2
    %v1030 = vadd.f32 %v1028, %v1029
    %v1031 = vrot.slane %v1030, 1
    %v1032 = vadd.f32 %v1030, %v1031
    %v1033 = vsel %vm1025, %v879, 0.0
    %v1034 = vrot.slane %v1033, 4
    %v1035 = vadd.f32 %v1033, %v1034
    %v1036 = vrot.slane %v1035, 2
    %v1037 = vadd.f32 %v1035, %v1036
    %v1038 = vrot.slane %v1037, 1
    %v1039 = vadd.f32 %v1037, %v1038
    %v1040 = vsel %vm1025, %v1019, 0.0
    %v1041 = vrot.slane %v1040, 4
    %v1042 = vadd.f32 %v1040, %v1041
    %v1043 = vrot.slane %v1042, 2
    %v1044 = vadd.f32 %v1042, %v1043
    %v1045 = vrot.slane %v1044, 1
    %v1046 = vadd.f32 %v1044, %v1045
    %v1047 = vsel %vm1025, %v1021, 0.0
    %v1048 = vrot.slane %v1047, 4
    %v1049 = vadd.f32 %v1047, %v1048
    %v1050 = vrot.slane %v1049, 2
    %v1051 = vadd.f32 %v1049, %v1050
    %v1052 = vrot.slane %v1051, 1
    %v1053 = vadd.f32 %v1051, %v1052
    %v1054 = vrcp.pop 2.0
    %v1055 = vmul.f32 %v1032, %v1054
    %v1056 = vmul.f32 %v1039, %v1054
    %v1057 = vmul.f32 %v1046, %v1054
    %v1058 = vmul.f32 %v1053, %v1054
    %v1059 = vmul.f32 %v877, %v877
    %v1060 = vmul.f32 %v879, %v879
    %v1061 = vmul.f32 %v1019, %v1019
    %v1062 = vmul.f32 %v1021, %v1021
    %v1063 = vsel %vm1025, %v1059, 0.0
    %v1064 = vrot.slane %v1063, 4
    %v1065 = vadd.f32 %v1063, %v1064
    %v1066 = vrot.slane %v1065, 2
    %v1067 = vadd.f32 %v1065, %v1066
    %v1068 = vrot.slane %v1067, 1
    %v1069 = vadd.f32 %v1067, %v1068
    %v1070 = vsel %vm1025, %v1060, 0.0
    %v1071 = vrot.slane %v1070, 4
    %v1072 = vadd.f32 %v1070, %v1071
    %v1073 = vrot.slane %v1072, 2
    %v1074 = vadd.f32 %v1072, %v1073
    %v1075 = vrot.slane %v1074, 1
    %v1076 = vadd.f32 %v1074, %v1075
    %v1077 = vsel %vm1025, %v1061, 0.0
    %v1078 = vrot.slane %v1077, 4
    %v1079 = vadd.f32 %v1077, %v1078
    %v1080 = vrot.slane %v1079, 2
    %v1081 = vadd.f32 %v1079, %v1080
    %v1082 = vrot.slane %v1081, 1
    %v1083 = vadd.f32 %v1081, %v1082
    %v1084 = vsel %vm1025, %v1062, 0.0
    %v1085 = vrot.slane %v1084, 4
    %v1086 = vadd.f32 %v1084, %v1085
    %v1087 = vrot.slane %v1086, 2
    %v1088 = vadd.f32 %v1086, %v1087
    %v1089 = vrot.slane %v1088, 1
    %v1090 = vadd.f32 %v1088, %v1089
    %v1091 = vmul.f32 %v1069, %v1054
    %v1092 = vmul.f32 %v1076, %v1054
    %v1093 = vmul.f32 %v1083, %v1054
    %v1094 = vmul.f32 %v1090, %v1054
    %v1095 = vmul.f32 %v1055, %v1055
    %v1096 = vmul.f32 %v1056, %v1056
    %v1097 = vmul.f32 %v1057, %v1057
    %v1098 = vmul.f32 %v1058, %v1058
    %v1099 = vsub.f32 %v1091, %v1095
    %v1100 = vsub.f32 %v1092, %v1096
    %v1101 = vsub.f32 %v1093, %v1097
    %v1102 = vsub.f32 %v1094, %v1098
    %v1103 = vadd.f32 %v1099, 0.001
    %v1104 = vadd.f32 %v1100, 0.001
    %v1105 = vadd.f32 %v1101, 0.001
    %v1106 = vadd.f32 %v1102, 0.001
    %v1107 = vrsqrt.pop %v1103
    %v1108 = vrsqrt.pop %v1104
    %v1109 = vrsqrt.pop %v1105
    %v1110 = vrsqrt.pop %v1106
    %v1115 = vcombine.low %v1107, %v1108
    %v1116 = vcombine.low %v1109, %v1110
    %v1118 = vunpack.c.l.s4 1966171168
    %v1119 = vunpack.c.0.s8 %v1118
    %v1120 = vlaneseq
    %v1121 = vshrl.u32 %v1120, 7
    %v1122 = vsub.s32 %v1119, %v1121
    %v1123 = vrot.slane %v1115, %v1122
    %v1125 = vunpack.c.l.s4 1966171168
    %v1126 = vunpack.c.0.s8 %v1125
    %v1127 = vlaneseq
    %v1128 = vshrl.u32 %v1127, 7
    %v1129 = vsub.s32 %v1126, %v1128
    %v1130 = vrot.slane %v1116, %v1129
    %v1131 = vcombine.low %v1123, %v1130
    %v1133 = vunpack.c.l.s4 1966171168
    %v1134 = vunpack.c.0.s8 %v1133
    %v1135 = vlaneseq
    %v1136 = vshrl.u32 %v1135, 7
    %v1137 = vsub.s32 %v1134, %v1136
    %v1138 = vrot.slane %v1131, %v1137
    %v1140 = vmul.f32 %v1023, %v1138
    %v1141 = vsub.f32 %v877, %v1055
    %v1142 = vsub.f32 %v879, %v1056
    %v1143 = vsub.f32 %v1019, %v1057
    %v1144 = vsub.f32 %v1021, %v1058
    %v1146 = vlaneseq
    %v1147 = vshrl.u32 %v1146, 7
    %v1148 = vsub.s32 0, %v1147
    %v1149 = vrot.slane %v1140, %v1148
    %v1150 = vlaneseq
    %v1151 = vshrl.u32 %v1150, 7
    %v1152 = vsub.s32 1, %v1151
    %v1153 = vrot.slane %v1140, %v1152
    %v1154 = vlaneseq
    %v1155 = vshrl.u32 %v1154, 7
    %v1156 = vsub.s32 2, %v1155
    %v1157 = vrot.slane %v1140, %v1156
    %v1158 = vlaneseq
    %v1159 = vshrl.u32 %v1158, 7
    %v1160 = vsub.s32 3, %v1159
    %v1161 = vrot.slane %v1140, %v1160
    %v1166 = vmul.f32 %v1141, %v1149
    %v1167 = vmul.f32 %v1142, %v1153
    %v1168 = vmul.f32 %v1143, %v1157
    %v1169 = vmul.f32 %v1144, %v1161
    %v1171 = vlaneseq
    %v1172 = vshrl.u32 %v1171, 7
    %v1173 = vsub.s32 0, %v1172
    %v1174 = vrot.slane %v1024, %v1173
    %v1175 = vlaneseq
    %v1176 = vshrl.u32 %v1175, 7
    %v1177 = vsub.s32 1, %v1176
    %v1178 = vrot.slane %v1024, %v1177
    %v1179 = vlaneseq
    %v1180 = vshrl.u32 %v1179, 7
    %v1181 = vsub.s32 2, %v1180
    %v1182 = vrot.slane %v1024, %v1181
    %v1183 = vlaneseq
    %v1184 = vshrl.u32 %v1183, 7
    %v1185 = vsub.s32 3, %v1184
    %v1186 = vrot.slane %v1024, %v1185
    %v1191 = vadd.f32 %v1166, %v1174
    %v1192 = vadd.f32 %v1167, %v1178
    %v1193 = vadd.f32 %v1168, %v1182
    %v1194 = vadd.f32 %v1169, %v1186
    %v1195 = vmax.f32 %v1191, 0.0
    %v1196 = vmax.f32 %v1192, 0.0
    %v1197 = vmax.f32 %v1193, 0.0
    %v1198 = vmax.f32 %v1194, 0.0
    %v1199 = vld [vmem:[#allocation16] sm:$0xff]
    %v1200 = vld [vmem:[#allocation16 + $0x8] sm:$0xff]
    %v1201 = vld [vmem:[#allocation16 + $0x10] sm:$0xff]
    %v1202 = vld [vmem:[#allocation16 + $0x18] sm:$0xff]
    %v1203 = vld [vmem:[#allocation16 + $0x20] sm:$0xff]
    %v1204 = vld [vmem:[#allocation16 + $0x28] sm:$0xff]
    %v1205 = vld [vmem:[#allocation16 + $0x30] sm:$0xff]
    %v1206 = vld [vmem:[#allocation16 + $0x38] sm:$0xff]
    %v1207 = vld [vmem:[#allocation16 + $0x40] sm:$0xff]
    %v1208 = vld [vmem:[#allocation16 + $0x48] sm:$0xff]
    %v1209 = vld [vmem:[#allocation16 + $0x50] sm:$0xff]
    %v1210 = vld [vmem:[#allocation16 + $0x58] sm:$0xff]
    %v1211 = vld [vmem:[#allocation16 + $0x60] sm:$0xff]
    %v1212 = vld [vmem:[#allocation16 + $0x68] sm:$0xff]
    %v1213 = vld [vmem:[#allocation16 + $0x70] sm:$0xff]
    %v1214 = vld [vmem:[#allocation16 + $0x78] sm:$0xff]
    %v1215 = vld [vmem:[#allocation16 + $0x80] sm:$0xff]
    %v1216 = vld [vmem:[#allocation16 + $0x88] sm:$0xff]
    %v1217 = vld [vmem:[#allocation16 + $0x90] sm:$0xff]
    %v1218 = vld [vmem:[#allocation16 + $0x98] sm:$0xff]
    %v1219 = vld [vmem:[#allocation16 + $0xa0] sm:$0xff]
    %v1220 = vld [vmem:[#allocation16 + $0xa8] sm:$0xff]
    %v1221 = vld [vmem:[#allocation16 + $0xb0] sm:$0xff]
    %v1222 = vld [vmem:[#allocation16 + $0xb8] sm:$0xff]
    %v1223 = vld [vmem:[#allocation16 + $0xc0] sm:$0xff]
    %v1224 = vld [vmem:[#allocation16 + $0xc8] sm:$0xff]
    %v1225 = vld [vmem:[#allocation16 + $0xd0] sm:$0xff]
    %v1226 = vld [vmem:[#allocation16 + $0xd8] sm:$0xff]
    %v1227 = vld [vmem:[#allocation16 + $0xe0] sm:$0xff]
    %v1228 = vld [vmem:[#allocation16 + $0xe8] sm:$0xff]
    %v1229 = vld [vmem:[#allocation16 + $0xf0] sm:$0xff]
    %v1230 = vld [vmem:[#allocation16 + $0xf8] sm:$0xff]
    %v1231 = vld [vmem:[#allocation16 + $0x100] sm:$0xff]
    %v1232 = vld [vmem:[#allocation16 + $0x108] sm:$0xff]
    %v1233 = vld [vmem:[#allocation16 + $0x110] sm:$0xff]
    %v1234 = vld [vmem:[#allocation16 + $0x118] sm:$0xff]
    %v1235 = vld [vmem:[#allocation16 + $0x120] sm:$0xff]
    %v1236 = vld [vmem:[#allocation16 + $0x128] sm:$0xff]
    %v1237 = vld [vmem:[#allocation16 + $0x130] sm:$0xff]
    %v1238 = vld [vmem:[#allocation16 + $0x138] sm:$0xff]
    %v1239 = vld [vmem:[#allocation16 + $0x140] sm:$0xff]
    %v1240 = vld [vmem:[#allocation16 + $0x148] sm:$0xff]
    %v1241 = vld [vmem:[#allocation16 + $0x150] sm:$0xff]
    %v1242 = vld [vmem:[#allocation16 + $0x158] sm:$0xff]
    %v1243 = vld [vmem:[#allocation16 + $0x160] sm:$0xff]
    %v1244 = vld [vmem:[#allocation16 + $0x168] sm:$0xff]
    %v1245 = vld [vmem:[#allocation16 + $0x170] sm:$0xff]
    %v1246 = vld [vmem:[#allocation16 + $0x178] sm:$0xff]
    %v1247 = vld [vmem:[#allocation16 + $0x180] sm:$0xff]
    %v1248 = vld [vmem:[#allocation16 + $0x188] sm:$0xff]
    %v1249 = vld [vmem:[#allocation16 + $0x190] sm:$0xff]
    %v1250 = vld [vmem:[#allocation16 + $0x198] sm:$0xff]
    %v1251 = vld [vmem:[#allocation16 + $0x1a0] sm:$0xff]
    %v1252 = vld [vmem:[#allocation16 + $0x1a8] sm:$0xff]
    %v1253 = vld [vmem:[#allocation16 + $0x1b0] sm:$0xff]
    %v1254 = vld [vmem:[#allocation16 + $0x1b8] sm:$0xff]
    %v1255 = vld [vmem:[#allocation16 + $0x1c0] sm:$0xff]
    %v1256 = vld [vmem:[#allocation16 + $0x1c8] sm:$0xff]
    %v1257 = vld [vmem:[#allocation16 + $0x1d0] sm:$0xff]
    %v1258 = vld [vmem:[#allocation16 + $0x1d8] sm:$0xff]
    %v1259 = vld [vmem:[#allocation16 + $0x1e0] sm:$0xff]
    %v1260 = vld [vmem:[#allocation16 + $0x1e8] sm:$0xff]
    %v1261 = vld [vmem:[#allocation16 + $0x1f0] sm:$0xff]
    %v1262 = vld [vmem:[#allocation16 + $0x1f8] sm:$0xff]
    %1263 = vmatprep.subr.mxu0 0.0
    %1264 = vmatpush1.msra.mxu0 %v1199
    %1265 = vmatprep.subr.mxu0 0.0
    %1266 = vmatpush1.msra.mxu0 %v1200
    %1267 = vmatprep.subr.mxu0 0.0
    %1268 = vmatpush1.msra.mxu0 %v1201
    %1269 = vmatprep.subr.mxu0 0.0
    %1270 = vmatpush1.msra.mxu0 %v1202
    %1271 = vmatprep.subr.mxu0 0.0
    %1272 = vmatpush1.msra.mxu0 %v1203
    %1273 = vmatprep.subr.mxu0 0.0
    %1274 = vmatpush1.msra.mxu0 %v1204
    %1275 = vmatprep.subr.mxu0 0.0
    %1276 = vmatpush1.msra.mxu0 %v1205
    %1277 = vmatprep.subr.mxu0 0.0
    %1278 = vmatpush1.msra.mxu0 %v1206
    %1279 = vmatprep.subr.mxu0 0.0
    %1280 = vmatpush1.msra.mxu0 %v1207
    %1281 = vmatprep.subr.mxu0 0.0
    %1282 = vmatpush1.msra.mxu0 %v1208
    %1283 = vmatprep.subr.mxu0 0.0
    %1284 = vmatpush1.msra.mxu0 %v1209
    %1285 = vmatprep.subr.mxu0 0.0
    %1286 = vmatpush1.msra.mxu0 %v1210
    %1287 = vmatprep.subr.mxu0 0.0
    %1288 = vmatpush1.msra.mxu0 %v1211
    %1289 = vmatprep.subr.mxu0 0.0
    %1290 = vmatpush1.msra.mxu0 %v1212
    %1291 = vmatprep.subr.mxu0 0.0
    %1292 = vmatpush1.msra.mxu0 %v1213
    %1293 = vmatprep.subr.mxu0 0.0
    %1294 = vmatpush1.msra.mxu0 %v1214
    %1295 = vmatprep.subr.mxu0 0.0
    %1296 = vmatpush1.msra.mxu0 %v1215
    %1297 = vmatprep.subr.mxu0 0.0
    %1298 = vmatpush1.msra.mxu0 %v1216
    %1299 = vmatprep.subr.mxu0 0.0
    %1300 = vmatpush1.msra.mxu0 %v1217
    %1301 = vmatprep.subr.mxu0 0.0
    %1302 = vmatpush1.msra.mxu0 %v1218
    %1303 = vmatprep.subr.mxu0 0.0
    %1304 = vmatpush1.msra.mxu0 %v1219
    %1305 = vmatprep.subr.mxu0 0.0
    %1306 = vmatpush1.msra.mxu0 %v1220
    %1307 = vmatprep.subr.mxu0 0.0
    %1308 = vmatpush1.msra.mxu0 %v1221
    %1309 = vmatprep.subr.mxu0 0.0
    %1310 = vmatpush1.msra.mxu0 %v1222
    %1311 = vmatprep.subr.mxu0 0.0
    %1312 = vmatpush1.msra.mxu0 %v1223
    %1313 = vmatprep.subr.mxu0 0.0
    %1314 = vmatpush1.msra.mxu0 %v1224
    %1315 = vmatprep.subr.mxu0 0.0
    %1316 = vmatpush1.msra.mxu0 %v1225
    %1317 = vmatprep.subr.mxu0 0.0
    %1318 = vmatpush1.msra.mxu0 %v1226
    %1319 = vmatprep.subr.mxu0 0.0
    %1320 = vmatpush1.msra.mxu0 %v1227
    %1321 = vmatprep.subr.mxu0 0.0
    %1322 = vmatpush1.msra.mxu0 %v1228
    %1323 = vmatprep.subr.mxu0 0.0
    %1324 = vmatpush1.msra.mxu0 %v1229
    %1325 = vmatprep.subr.mxu0 0.0
    %1326 = vmatpush1.msra.mxu0 %v1230
    %1327 = vmatprep.mubr.f32.mxu0 %v1196
    %1328 = vmatmul.mubr.f32.gmra.mrb[0].mxu0 %v1195
    %v1329 = vpop.f32.mrb[0].mxu0
    %v1330 = vadd.f32 0.0, %v1329
    %v1331 = vpop.f32.mrb[0].mxu0
    %1332 = vdwg.mxu0
    %1333 = vmatprep.subr.mxu0 0.0
    %1334 = vmatpush1.msra.mxu0 %v1231
    %1335 = vmatprep.subr.mxu0 0.0
    %1336 = vmatpush1.msra.mxu0 %v1232
    %1337 = vmatprep.subr.mxu0 0.0
    %1338 = vmatpush1.msra.mxu0 %v1233
    %1339 = vmatprep.subr.mxu0 0.0
    %1340 = vmatpush1.msra.mxu0 %v1234
    %1341 = vmatprep.subr.mxu0 0.0
    %1342 = vmatpush1.msra.mxu0 %v1235
    %1343 = vmatprep.subr.mxu0 0.0
    %1344 = vmatpush1.msra.mxu0 %v1236
    %1345 = vmatprep.subr.mxu0 0.0
    %1346 = vmatpush1.msra.mxu0 %v1237
    %1347 = vmatprep.subr.mxu0 0.0
    %1348 = vmatpush1.msra.mxu0 %v1238
    %1349 = vmatprep.subr.mxu0 0.0
    %1350 = vmatpush1.msra.mxu0 %v1239
    %1351 = vmatprep.subr.mxu0 0.0
    %1352 = vmatpush1.msra.mxu0 %v1240
    %1353 = vmatprep.subr.mxu0 0.0
    %1354 = vmatpush1.msra.mxu0 %v1241
    %1355 = vmatprep.subr.mxu0 0.0
    %1356 = vmatpush1.msra.mxu0 %v1242
    %1357 = vmatprep.subr.mxu0 0.0
    %1358 = vmatpush1.msra.mxu0 %v1243
    %1359 = vmatprep.subr.mxu0 0.0
    %1360 = vmatpush1.msra.mxu0 %v1244
    %1361 = vmatprep.subr.mxu0 0.0
    %1362 = vmatpush1.msra.mxu0 %v1245
    %1363 = vmatprep.subr.mxu0 0.0
    %1364 = vmatpush1.msra.mxu0 %v1246
    %1365 = vmatprep.subr.mxu0 0.0
    %1366 = vmatpush1.msra.mxu0 %v1247
    %1367 = vmatprep.subr.mxu0 0.0
    %1368 = vmatpush1.msra.mxu0 %v1248
    %1369 = vmatprep.subr.mxu0 0.0
    %1370 = vmatpush1.msra.mxu0 %v1249
    %1371 = vmatprep.subr.mxu0 0.0
    %1372 = vmatpush1.msra.mxu0 %v1250
    %1373 = vmatprep.subr.mxu0 0.0
    %1374 = vmatpush1.msra.mxu0 %v1251
    %1375 = vmatprep.subr.mxu0 0.0
    %1376 = vmatpush1.msra.mxu0 %v1252
    %1377 = vmatprep.subr.mxu0 0.0
    %1378 = vmatpush1.msra.mxu0 %v1253
    %1379 = vmatprep.subr.mxu0 0.0
    %1380 = vmatpush1.msra.mxu0 %v1254
    %1381 = vmatprep.subr.mxu0 0.0
    %1382 = vmatpush1.msra.mxu0 %v1255
    %1383 = vmatprep.subr.mxu0 0.0
    %1384 = vmatpush1.msra.mxu0 %v1256
    %1385 = vmatprep.subr.mxu0 0.0
    %1386 = vmatpush1.msra.mxu0 %v1257
    %1387 = vmatprep.subr.mxu0 0.0
    %1388 = vmatpush1.msra.mxu0 %v1258
    %1389 = vmatprep.subr.mxu0 0.0
    %1390 = vmatpush1.msra.mxu0 %v1259
    %1391 = vmatprep.subr.mxu0 0.0
    %1392 = vmatpush1.msra.mxu0 %v1260
    %1393 = vmatprep.subr.mxu0 0.0
    %1394 = vmatpush1.msra.mxu0 %v1261
    %1395 = vmatprep.subr.mxu0 0.0
    %1396 = vmatpush1.msra.mxu0 %v1262
    %1397 = vmatprep.mubr.f32.mxu0 %v1198
    %1398 = vmatmul.mubr.f32.gmra.mrb[0].mxu0 %v1197
    %v1399 = vpop.f32.mrb[0].mxu0
    %v1400 = vadd.f32 %v1330, %v1399
    %v1401 = vpop.f32.mrb[0].mxu0
    %1402 = vdwg.mxu0
    %v1403 = vld [vmem:[#allocation17] sm:$0x1]
    %v1404 = vld [vmem:[#allocation19] sm:$0x1]
    %v1405 = vsel %vm1025, %v1400, 0.0
    %v1406 = vrot.slane %v1405, 4
    %v1407 = vadd.f32 %v1405, %v1406
    %v1408 = vrot.slane %v1407, 2
    %v1409 = vadd.f32 %v1407, %v1408
    %v1410 = vrot.slane %v1409, 1
    %v1411 = vadd.f32 %v1409, %v1410
    %v1412 = vmul.f32 %v1411, %v1054
    %v1413 = vmul.f32 %v1400, %v1400
    %v1414 = vsel %vm1025, %v1413, 0.0
    %v1415 = vrot.slane %v1414, 4
    %v1416 = vadd.f32 %v1414, %v1415
    %v1417 = vrot.slane %v1416, 2
    %v1418 = vadd.f32 %v1416, %v1417
    %v1419 = vrot.slane %v1418, 1
    %v1420 = vadd.f32 %v1418, %v1419
    %v1421 = vmul.f32 %v1420, %v1054
    %v1422 = vmul.f32 %v1412, %v1412
    %v1423 = vsub.f32 %v1421, %v1422
    %v1424 = vadd.f32 %v1423, 0.001
    %v1425 = vrsqrt.pop %v1424
    %v1426 = vmul.f32 %v1403, %v1425
    %v1427 = vsub.f32 %v1400, %v1412
    %v1429 = vlaneseq
    %v1430 = vshrl.u32 %v1429, 7
    %v1431 = vsub.s32 0, %v1430
    %v1432 = vrot.slane %v1426, %v1431
    %v1434 = vmul.f32 %v1427, %v1432
    %v1436 = vlaneseq
    %v1437 = vshrl.u32 %v1436, 7
    %v1438 = vsub.s32 0, %v1437
    %v1439 = vrot.slane %v1404, %v1438
    %v1441 = vadd.f32 %v1434, %v1439
    %v1442 = vmax.f32 %v1441, 0.0
    %v1443 = vld [vmem:[#allocation7] sm:$0x3f]
    %v1445 = vcombine.high %v1443, %v1443
    %v1447 = vunpack.c.l.s4 1983009808
    %v1448 = vunpack.c.0.s8 %v1447
    %v1449 = vlaneseq
    %v1450 = vshrl.u32 %v1449, 7
    %v1451 = vsub.s32 %v1448, %v1450
    %v1452 = vrot.slane %v1443, %v1451
    %v1454 = vunpack.c.l.s4 1983009808
    %v1455 = vunpack.c.0.s8 %v1454
    %v1456 = vlaneseq
    %v1457 = vshrl.u32 %v1456, 7
    %v1458 = vsub.s32 %v1455, %v1457
    %v1459 = vrot.slane %v1445, %v1458
    %v1460 = vcombine.high %v1452, %v1452
    %1464 = vmatprep.subr.mxu0 %v528
    %1465 = vmatpush1.msra.mxu0 %v527
    %1466 = vmatprep.subr.mxu0 %v532
    %1467 = vmatpush1.msra.mxu0 %v531
    %1468 = vmatprep.subr.mxu0 %v536
    %1469 = vmatpush1.msra.mxu0 %v535
    %1470 = vmatprep.subr.mxu0 %v540
    %1471 = vmatpush1.msra.mxu0 %v539
    %1472 = vmatprep.subr.mxu0 %v544
    %1473 = vmatpush1.msra.mxu0 %v543
    %1474 = vmatprep.subr.mxu0 %v548
    %1475 = vmatpush1.msra.mxu0 %v547
    %1476 = vmatprep.subr.mxu0 %v552
    %1477 = vmatpush1.msra.mxu0 %v551
    %1478 = vmatprep.subr.mxu0 %v556
    %1479 = vmatpush1.msra.mxu0 %v555
    %1480 = vmatprep.subr.mxu0 %v560
    %1481 = vmatpush1.msra.mxu0 %v559
    %1482 = vmatprep.subr.mxu0 %v564
    %1483 = vmatpush1.msra.mxu0 %v563
    %1484 = vmatprep.subr.mxu0 %v568
    %1485 = vmatpush1.msra.mxu0 %v567
    %1486 = vmatprep.subr.mxu0 %v572
    %1487 = vmatpush1.msra.mxu0 %v571
    %1488 = vmatprep.subr.mxu0 %v576
    %1489 = vmatpush1.msra.mxu0 %v575
    %1490 = vmatprep.subr.mxu0 %v580
    %1491 = vmatpush1.msra.mxu0 %v579
    %1492 = vmatprep.subr.mxu0 %v584
    %1493 = vmatpush1.msra.mxu0 %v583
    %1494 = vmatprep.subr.mxu0 %v588
    %1495 = vmatpush1.msra.mxu0 %v587
    %1496 = vmatprep.subr.mxu0 %v592
    %1497 = vmatpush1.msra.mxu0 %v591
    %1498 = vmatprep.subr.mxu0 %v596
    %1499 = vmatpush1.msra.mxu0 %v595
    %1500 = vmatprep.subr.mxu0 %v600
    %1501 = vmatpush1.msra.mxu0 %v599
    %1502 = vmatprep.subr.mxu0 %v604
    %1503 = vmatpush1.msra.mxu0 %v603
    %1504 = vmatprep.subr.mxu0 %v608
    %1505 = vmatpush1.msra.mxu0 %v607
    %1506 = vmatprep.subr.mxu0 %v612
    %1507 = vmatpush1.msra.mxu0 %v611
    %1508 = vmatprep.subr.mxu0 %v616
    %1509 = vmatpush1.msra.mxu0 %v615
    %1510 = vmatprep.subr.mxu0 %v620
    %1511 = vmatpush1.msra.mxu0 %v619
    %1512 = vmatprep.subr.mxu0 %v624
    %1513 = vmatpush1.msra.mxu0 %v623
    %1514 = vmatprep.subr.mxu0 %v628
    %1515 = vmatpush1.msra.mxu0 %v627
    %1516 = vmatprep.subr.mxu0 %v632
    %1517 = vmatpush1.msra.mxu0 %v631
    %1518 = vmatprep.subr.mxu0 %v636
    %1519 = vmatpush1.msra.mxu0 %v635
    %1520 = vmatprep.subr.mxu0 %v640
    %1521 = vmatpush1.msra.mxu0 %v639
    %1522 = vmatprep.subr.mxu0 %v644
    %1523 = vmatpush1.msra.mxu0 %v643
    %1524 = vmatprep.subr.mxu0 %v648
    %1525 = vmatpush1.msra.mxu0 %v647
    %1526 = vmatprep.subr.mxu0 %v652
    %1527 = vmatpush1.msra.mxu0 %v651
    %1528 = vmatprep.mubr.f32.mxu0 %v1460
    %1529 = vmatmul.mubr.f32.gmra.mrb[0].mxu0 %v1452
    %v1530 = vpop.f32.mrb[0].mxu0
    %v1531 = vadd.f32 0.0, %v1530
    %v1532 = vpop.f32.mrb[0].mxu0
    %v1533 = vadd.f32 0.0, %v1532
    %1534 = vdwg.mxu0
    %1535 = vmatprep.subr.mxu0 %v656
    %1536 = vmatpush1.msra.mxu0 %v655
    %1537 = vmatprep.subr.mxu0 %v660
    %1538 = vmatpush1.msra.mxu0 %v659
    %1539 = vmatprep.subr.mxu0 %v664
    %1540 = vmatpush1.msra.mxu0 %v663
    %1541 = vmatprep.subr.mxu0 %v668
    %1542 = vmatpush1.msra.mxu0 %v667
    %1543 = vmatprep.subr.mxu0 %v672
    %1544 = vmatpush1.msra.mxu0 %v671
    %1545 = vmatprep.subr.mxu0 %v676
    %1546 = vmatpush1.msra.mxu0 %v675
    %1547 = vmatprep.subr.mxu0 %v680
    %1548 = vmatpush1.msra.mxu0 %v679
    %1549 = vmatprep.subr.mxu0 %v684
    %1550 = vmatpush1.msra.mxu0 %v683
    %1551 = vmatprep.subr.mxu0 %v688
    %1552 = vmatpush1.msra.mxu0 %v687
    %1553 = vmatprep.subr.mxu0 %v692
    %1554 = vmatpush1.msra.mxu0 %v691
    %1555 = vmatprep.subr.mxu0 %v696
    %1556 = vmatpush1.msra.mxu0 %v695
    %1557 = vmatprep.subr.mxu0 %v700
    %1558 = vmatpush1.msra.mxu0 %v699
    %1559 = vmatprep.subr.mxu0 %v704
    %1560 = vmatpush1.msra.mxu0 %v703
    %1561 = vmatprep.subr.mxu0 %v708
    %1562 = vmatpush1.msra.mxu0 %v707
    %1563 = vmatprep.subr.mxu0 %v712
    %1564 = vmatpush1.msra.mxu0 %v711
    %1565 = vmatprep.subr.mxu0 %v716
    %1566 = vmatpush1.msra.mxu0 %v715
    %1567 = vmatprep.subr.mxu0 0.0
    %1568 = vmatpush1.msra.mxu0 0.0
    %1569 = vmatprep.subr.mxu0 0.0
    %1570 = vmatpush1.msra.mxu0 0.0
    %1571 = vmatprep.subr.mxu0 0.0
    %1572 = vmatpush1.msra.mxu0 0.0
    %1573 = vmatprep.subr.mxu0 0.0
    %1574 = vmatpush1.msra.mxu0 0.0
    %1575 = vmatprep.subr.mxu0 0.0
    %1576 = vmatpush1.msra.mxu0 0.0
    %1577 = vmatprep.subr.mxu0 0.0
    %1578 = vmatpush1.msra.mxu0 0.0
    %1579 = vmatprep.subr.mxu0 0.0
    %1580 = vmatpush1.msra.mxu0 0.0
    %1581 = vmatprep.subr.mxu0 0.0
    %1582 = vmatpush1.msra.mxu0 0.0
    %1583 = vmatprep.subr.mxu0 0.0
    %1584 = vmatpush1.msra.mxu0 0.0
    %1585 = vmatprep.subr.mxu0 0.0
    %1586 = vmatpush1.msra.mxu0 0.0
    %1587 = vmatprep.subr.mxu0 0.0
    %1588 = vmatpush1.msra.mxu0 0.0
    %1589 = vmatprep.subr.mxu0 0.0
    %1590 = vmatpush1.msra.mxu0 0.0
    %1591 = vmatprep.subr.mxu0 0.0
    %1592 = vmatpush1.msra.mxu0 0.0
    %1593 = vmatprep.subr.mxu0 0.0
    %1594 = vmatpush1.msra.mxu0 0.0
    %1595 = vmatprep.subr.mxu0 0.0
    %1596 = vmatpush1.msra.mxu0 0.0
    %1597 = vmatprep.subr.mxu0 0.0
    %1598 = vmatpush1.msra.mxu0 0.0
    %1599 = vmatprep.mubr.f32.mxu0 0.0
    %1600 = vmatmul.mubr.f32.gmra.mrb[0].mxu0 %v1459
    %v1601 = vpop.f32.mrb[0].mxu0
    %v1602 = vadd.f32 %v1531, %v1601
    %v1603 = vpop.f32.mrb[0].mxu0
    %v1604 = vadd.f32 %v1533, %v1603
    %1605 = vdwg.mxu0
    %1606 = vmatprep.subr.mxu0 %v530
    %1607 = vmatpush1.msra.mxu0 %v529
    %1608 = vmatprep.subr.mxu0 %v534
    %1609 = vmatpush1.msra.mxu0 %v533
    %1610 = vmatprep.subr.mxu0 %v538
    %1611 = vmatpush1.msra.mxu0 %v537
    %1612 = vmatprep.subr.mxu0 %v542
    %1613 = vmatpush1.msra.mxu0 %v541
    %1614 = vmatprep.subr.mxu0 %v546
    %1615 = vmatpush1.msra.mxu0 %v545
    %1616 = vmatprep.subr.mxu0 %v550
    %1617 = vmatpush1.msra.mxu0 %v549
    %1618 = vmatprep.subr.mxu0 %v554
    %1619 = vmatpush1.msra.mxu0 %v553
    %1620 = vmatprep.subr.mxu0 %v558
    %1621 = vmatpush1.msra.mxu0 %v557
    %1622 = vmatprep.subr.mxu0 %v562
    %1623 = vmatpush1.msra.mxu0 %v561
    %1624 = vmatprep.subr.mxu0 %v566
    %1625 = vmatpush1.msra.mxu0 %v565
    %1626 = vmatprep.subr.mxu0 %v570
    %1627 = vmatpush1.msra.mxu0 %v569
    %1628 = vmatprep.subr.mxu0 %v574
    %1629 = vmatpush1.msra.mxu0 %v573
    %1630 = vmatprep.subr.mxu0 %v578
    %1631 = vmatpush1.msra.mxu0 %v577
    %1632 = vmatprep.subr.mxu0 %v582
    %1633 = vmatpush1.msra.mxu0 %v581
    %1634 = vmatprep.subr.mxu0 %v586
    %1635 = vmatpush1.msra.mxu0 %v585
    %1636 = vmatprep.subr.mxu0 %v590
    %1637 = vmatpush1.msra.mxu0 %v589
    %1638 = vmatprep.subr.mxu0 %v594
    %1639 = vmatpush1.msra.mxu0 %v593
    %1640 = vmatprep.subr.mxu0 %v598
    %1641 = vmatpush1.msra.mxu0 %v597
    %1642 = vmatprep.subr.mxu0 %v602
    %1643 = vmatpush1.msra.mxu0 %v601
    %1644 = vmatprep.subr.mxu0 %v606
    %1645 = vmatpush1.msra.mxu0 %v605
    %1646 = vmatprep.subr.mxu0 %v610
    %1647 = vmatpush1.msra.mxu0 %v609
    %1648 = vmatprep.subr.mxu0 %v614
    %1649 = vmatpush1.msra.mxu0 %v613
    %1650 = vmatprep.subr.mxu0 %v618
    %1651 = vmatpush1.msra.mxu0 %v617
    %1652 = vmatprep.subr.mxu0 %v622
    %1653 = vmatpush1.msra.mxu0 %v621
    %1654 = vmatprep.subr.mxu0 %v626
    %1655 = vmatpush1.msra.mxu0 %v625
    %1656 = vmatprep.subr.mxu0 %v630
    %1657 = vmatpush1.msra.mxu0 %v629
    %1658 = vmatprep.subr.mxu0 %v634
    %1659 = vmatpush1.msra.mxu0 %v633
    %1660 = vmatprep.subr.mxu0 %v638
    %1661 = vmatpush1.msra.mxu0 %v637
    %1662 = vmatprep.subr.mxu0 %v642
    %1663 = vmatpush1.msra.mxu0 %v641
    %1664 = vmatprep.subr.mxu0 %v646
    %1665 = vmatpush1.msra.mxu0 %v645
    %1666 = vmatprep.subr.mxu0 %v650
    %1667 = vmatpush1.msra.mxu0 %v649
    %1668 = vmatprep.subr.mxu0 %v654
    %1669 = vmatpush1.msra.mxu0 %v653
    %1670 = vmatprep.mubr.f32.mxu0 %v1460
    %1671 = vmatmul.mubr.f32.gmra.mrb[0].mxu0 %v1452
    %v1672 = vpop.f32.mrb[0].mxu0
    %v1673 = vadd.f32 0.0, %v1672
    %v1674 = vpop.f32.mrb[0].mxu0
    %v1675 = vadd.f32 0.0, %v1674
    %1676 = vdwg.mxu0
    %1677 = vmatprep.subr.mxu0 %v658
    %1678 = vmatpush1.msra.mxu0 %v657
    %1679 = vmatprep.subr.mxu0 %v662
    %1680 = vmatpush1.msra.mxu0 %v661
    %1681 = vmatprep.subr.mxu0 %v666
    %1682 = vmatpush1.msra.mxu0 %v665
    %1683 = vmatprep.subr.mxu0 %v670
    %1684 = vmatpush1.msra.mxu0 %v669
    %1685 = vmatprep.subr.mxu0 %v674
    %1686 = vmatpush1.msra.mxu0 %v673
    %1687 = vmatprep.subr.mxu0 %v678
    %1688 = vmatpush1.msra.mxu0 %v677
    %1689 = vmatprep.subr.mxu0 %v682
    %1690 = vmatpush1.msra.mxu0 %v681
    %1691 = vmatprep.subr.mxu0 %v686
    %1692 = vmatpush1.msra.mxu0 %v685
    %1693 = vmatprep.subr.mxu0 %v690
    %1694 = vmatpush1.msra.mxu0 %v689
    %1695 = vmatprep.subr.mxu0 %v694
    %1696 = vmatpush1.msra.mxu0 %v693
    %1697 = vmatprep.subr.mxu0 %v698
    %1698 = vmatpush1.msra.mxu0 %v697
    %1699 = vmatprep.subr.mxu0 %v702
    %1700 = vmatpush1.msra.mxu0 %v701
    %1701 = vmatprep.subr.mxu0 %v706
    %1702 = vmatpush1.msra.mxu0 %v705
    %1703 = vmatprep.subr.mxu0 %v710
    %1704 = vmatpush1.msra.mxu0 %v709
    %1705 = vmatprep.subr.mxu0 %v714
    %1706 = vmatpush1.msra.mxu0 %v713
    %1707 = vmatprep.subr.mxu0 %v718
    %1708 = vmatpush1.msra.mxu0 %v717
    %1709 = vmatprep.subr.mxu0 0.0
    %1710 = vmatpush1.msra.mxu0 0.0
    %1711 = vmatprep.subr.mxu0 0.0
    %1712 = vmatpush1.msra.mxu0 0.0
    %1713 = vmatprep.subr.mxu0 0.0
    %1714 = vmatpush1.msra.mxu0 0.0
    %1715 = vmatprep.subr.mxu0 0.0
    %1716 = vmatpush1.msra.mxu0 0.0
    %1717 = vmatprep.subr.mxu0 0.0
    %1718 = vmatpush1.msra.mxu0 0.0
    %1719 = vmatprep.subr.mxu0 0.0
    %1720 = vmatpush1.msra.mxu0 0.0
    %1721 = vmatprep.subr.mxu0 0.0
    %1722 = vmatpush1.msra.mxu0 0.0
    %1723 = vmatprep.subr.mxu0 0.0
    %1724 = vmatpush1.msra.mxu0 0.0
    %1725 = vmatprep.subr.mxu0 0.0
    %1726 = vmatpush1.msra.mxu0 0.0
    %1727 = vmatprep.subr.mxu0 0.0
    %1728 = vmatpush1.msra.mxu0 0.0
    %1729 = vmatprep.subr.mxu0 0.0
    %1730 = vmatpush1.msra.mxu0 0.0
    %1731 = vmatprep.subr.mxu0 0.0
    %1732 = vmatpush1.msra.mxu0 0.0
    %1733 = vmatprep.subr.mxu0 0.0
    %1734 = vmatpush1.msra.mxu0 0.0
    %1735 = vmatprep.subr.mxu0 0.0
    %1736 = vmatpush1.msra.mxu0 0.0
    %1737 = vmatprep.subr.mxu0 0.0
    %1738 = vmatpush1.msra.mxu0 0.0
    %1739 = vmatprep.subr.mxu0 0.0
    %1740 = vmatpush1.msra.mxu0 0.0
    %1741 = vmatprep.mubr.f32.mxu0 0.0
    %1742 = vmatmul.mubr.f32.gmra.mrb[0].mxu0 %v1459
    %v1743 = vpop.f32.mrb[0].mxu0
    %v1744 = vadd.f32 %v1673, %v1743
    %v1745 = vpop.f32.mrb[0].mxu0
    %v1746 = vadd.f32 %v1675, %v1745
    %1747 = vdwg.mxu0
    %v1748 = vsel %vm1025, %v1602, 0.0
    %v1749 = vrot.slane %v1748, 4
    %v1750 = vadd.f32 %v1748, %v1749
    %v1751 = vrot.slane %v1750, 2
    %v1752 = vadd.f32 %v1750, %v1751
    %v1753 = vrot.slane %v1752, 1
    %v1754 = vadd.f32 %v1752, %v1753
    %v1755 = vsel %vm1025, %v1604, 0.0
    %v1756 = vrot.slane %v1755, 4
    %v1757 = vadd.f32 %v1755, %v1756
    %v1758 = vrot.slane %v1757, 2
    %v1759 = vadd.f32 %v1757, %v1758
    %v1760 = vrot.slane %v1759, 1
    %v1761 = vadd.f32 %v1759, %v1760
    %v1762 = vsel %vm1025, %v1744, 0.0
    %v1763 = vrot.slane %v1762, 4
    %v1764 = vadd.f32 %v1762, %v1763
    %v1765 = vrot.slane %v1764, 2
    %v1766 = vadd.f32 %v1764, %v1765
    %v1767 = vrot.slane %v1766, 1
    %v1768 = vadd.f32 %v1766, %v1767
    %v1769 = vsel %vm1025, %v1746, 0.0
    %v1770 = vrot.slane %v1769, 4
    %v1771 = vadd.f32 %v1769, %v1770
    %v1772 = vrot.slane %v1771, 2
    %v1773 = vadd.f32 %v1771, %v1772
    %v1774 = vrot.slane %v1773, 1
    %v1775 = vadd.f32 %v1773, %v1774
    %v1776 = vmul.f32 %v1754, %v1054
    %v1777 = vmul.f32 %v1761, %v1054
    %v1778 = vmul.f32 %v1768, %v1054
    %v1779 = vmul.f32 %v1775, %v1054
    %v1780 = vmul.f32 %v1602, %v1602
    %v1781 = vmul.f32 %v1604, %v1604
    %v1782 = vmul.f32 %v1744, %v1744
    %v1783 = vmul.f32 %v1746, %v1746
    %v1784 = vsel %vm1025, %v1780, 0.0
    %v1785 = vrot.slane %v1784, 4
    %v1786 = vadd.f32 %v1784, %v1785
    %v1787 = vrot.slane %v1786, 2
    %v1788 = vadd.f32 %v1786, %v1787
    %v1789 = vrot.slane %v1788, 1
    %v1790 = vadd.f32 %v1788, %v1789
    %v1791 = vsel %vm1025, %v1781, 0.0
    %v1792 = vrot.slane %v1791, 4
    %v1793 = vadd.f32 %v1791, %v1792
    %v1794 = vrot.slane %v1793, 2
    %v1795 = vadd.f32 %v1793, %v1794
    %v1796 = vrot.slane %v1795, 1
    %v1797 = vadd.f32 %v1795, %v1796
    %v1798 = vsel %vm1025, %v1782, 0.0
    %v1799 = vrot.slane %v1798, 4
    %v1800 = vadd.f32 %v1798, %v1799
    %v1801 = vrot.slane %v1800, 2
    %v1802 = vadd.f32 %v1800, %v1801
    %v1803 = vrot.slane %v1802, 1
    %v1804 = vadd.f32 %v1802, %v1803
    %v1805 = vsel %vm1025, %v1783, 0.0
    %v1806 = vrot.slane %v1805, 4
    %v1807 = vadd.f32 %v1805, %v1806
    %v1808 = vrot.slane %v1807, 2
    %v1809 = vadd.f32 %v1807, %v1808
    %v1810 = vrot.slane %v1809, 1
    %v1811 = vadd.f32 %v1809, %v1810
    %v1812 = vmul.f32 %v1790, %v1054
    %v1813 = vmul.f32 %v1797, %v1054
    %v1814 = vmul.f32 %v1804, %v1054
    %v1815 = vmul.f32 %v1811, %v1054
    %v1816 = vmul.f32 %v1776, %v1776
    %v1817 = vmul.f32 %v1777, %v1777
    %v1818 = vmul.f32 %v1778, %v1778
    %v1819 = vmul.f32 %v1779, %v1779
    %v1820 = vsub.f32 %v1812, %v1816
    %v1821 = vsub.f32 %v1813, %v1817
    %v1822 = vsub.f32 %v1814, %v1818
    %v1823 = vsub.f32 %v1815, %v1819
    %v1824 = vadd.f32 %v1820, 0.001
    %v1825 = vadd.f32 %v1821, 0.001
    %v1826 = vadd.f32 %v1822, 0.001
    %v1827 = vadd.f32 %v1823, 0.001
    %v1828 = vrsqrt.pop %v1824
    %v1829 = vrsqrt.pop %v1825
    %v1830 = vrsqrt.pop %v1826
    %v1831 = vrsqrt.pop %v1827
    %v1836 = vcombine.low %v1828, %v1829
    %v1837 = vcombine.low %v1830, %v1831
    %v1839 = vunpack.c.l.s4 1966171168
    %v1840 = vunpack.c.0.s8 %v1839
    %v1841 = vlaneseq
    %v1842 = vshrl.u32 %v1841, 7
    %v1843 = vsub.s32 %v1840, %v1842
    %v1844 = vrot.slane %v1836, %v1843
    %v1846 = vunpack.c.l.s4 1966171168
    %v1847 = vunpack.c.0.s8 %v1846
    %v1848 = vlaneseq
    %v1849 = vshrl.u32 %v1848, 7
    %v1850 = vsub.s32 %v1847, %v1849
    %v1851 = vrot.slane %v1837, %v1850
    %v1852 = vcombine.low %v1844, %v1851
    %v1854 = vunpack.c.l.s4 1966171168
    %v1855 = vunpack.c.0.s8 %v1854
    %v1856 = vlaneseq
    %v1857 = vshrl.u32 %v1856, 7
    %v1858 = vsub.s32 %v1855, %v1857
    %v1859 = vrot.slane %v1852, %v1858
    %v1861 = vmul.f32 %v1023, %v1859
    %v1862 = vsub.f32 %v1602, %v1776
    %v1863 = vsub.f32 %v1604, %v1777
    %v1864 = vsub.f32 %v1744, %v1778
    %v1865 = vsub.f32 %v1746, %v1779
    %v1867 = vlaneseq
    %v1868 = vshrl.u32 %v1867, 7
    %v1869 = vsub.s32 0, %v1868
    %v1870 = vrot.slane %v1861, %v1869
    %v1871 = vlaneseq
    %v1872 = vshrl.u32 %v1871, 7
    %v1873 = vsub.s32 1, %v1872
    %v1874 = vrot.slane %v1861, %v1873
    %v1875 = vlaneseq
    %v1876 = vshrl.u32 %v1875, 7
    %v1877 = vsub.s32 2, %v1876
    %v1878 = vrot.slane %v1861, %v1877
    %v1879 = vlaneseq
    %v1880 = vshrl.u32 %v1879, 7
    %v1881 = vsub.s32 3, %v1880
    %v1882 = vrot.slane %v1861, %v1881
    %v1887 = vmul.f32 %v1862, %v1870
    %v1888 = vmul.f32 %v1863, %v1874
    %v1889 = vmul.f32 %v1864, %v1878
    %v1890 = vmul.f32 %v1865, %v1882
    %v1891 = vadd.f32 %v1887, %v1174
    %v1892 = vadd.f32 %v1888, %v1178
    %v1893 = vadd.f32 %v1889, %v1182
    %v1894 = vadd.f32 %v1890, %v1186
    %v1895 = vmax.f32 %v1891, 0.0
    %v1896 = vmax.f32 %v1892, 0.0
    %v1897 = vmax.f32 %v1893, 0.0
    %v1898 = vmax.f32 %v1894, 0.0
    %1899 = vmatprep.subr.mxu0 0.0
    %1900 = vmatpush1.msra.mxu0 %v1199
    %1901 = vmatprep.subr.mxu0 0.0
    %1902 = vmatpush1.msra.mxu0 %v1200
    %1903 = vmatprep.subr.mxu0 0.0
    %1904 = vmatpush1.msra.mxu0 %v1201
    %1905 = vmatprep.subr.mxu0 0.0
    %1906 = vmatpush1.msra.mxu0 %v1202
    %1907 = vmatprep.subr.mxu0 0.0
    %1908 = vmatpush1.msra.mxu0 %v1203
    %1909 = vmatprep.subr.mxu0 0.0
    %1910 = vmatpush1.msra.mxu0 %v1204
    %1911 = vmatprep.subr.mxu0 0.0
    %1912 = vmatpush1.msra.mxu0 %v1205
    %1913 = vmatprep.subr.mxu0 0.0
    %1914 = vmatpush1.msra.mxu0 %v1206
    %1915 = vmatprep.subr.mxu0 0.0
    %1916 = vmatpush1.msra.mxu0 %v1207
    %1917 = vmatprep.subr.mxu0 0.0
    %1918 = vmatpush1.msra.mxu0 %v1208
    %1919 = vmatprep.subr.mxu0 0.0
    %1920 = vmatpush1.msra.mxu0 %v1209
    %1921 = vmatprep.subr.mxu0 0.0
    %1922 = vmatpush1.msra.mxu0 %v1210
    %1923 = vmatprep.subr.mxu0 0.0
    %1924 = vmatpush1.msra.mxu0 %v1211
    %1925 = vmatprep.subr.mxu0 0.0
    %1926 = vmatpush1.msra.mxu0 %v1212
    %1927 = vmatprep.subr.mxu0 0.0
    %1928 = vmatpush1.msra.mxu0 %v1213
    %1929 = vmatprep.subr.mxu0 0.0
    %1930 = vmatpush1.msra.mxu0 %v1214
    %1931 = vmatprep.subr.mxu0 0.0
    %1932 = vmatpush1.msra.mxu0 %v1215
    %1933 = vmatprep.subr.mxu0 0.0
    %1934 = vmatpush1.msra.mxu0 %v1216
    %1935 = vmatprep.subr.mxu0 0.0
    %1936 = vmatpush1.msra.mxu0 %v1217
    %1937 = vmatprep.subr.mxu0 0.0
    %1938 = vmatpush1.msra.mxu0 %v1218
    %1939 = vmatprep.subr.mxu0 0.0
    %1940 = vmatpush1.msra.mxu0 %v1219
    %1941 = vmatprep.subr.mxu0 0.0
    %1942 = vmatpush1.msra.mxu0 %v1220
    %1943 = vmatprep.subr.mxu0 0.0
    %1944 = vmatpush1.msra.mxu0 %v1221
    %1945 = vmatprep.subr.mxu0 0.0
    %1946 = vmatpush1.msra.mxu0 %v1222
    %1947 = vmatprep.subr.mxu0 0.0
    %1948 = vmatpush1.msra.mxu0 %v1223
    %1949 = vmatprep.subr.mxu0 0.0
    %1950 = vmatpush1.msra.mxu0 %v1224
    %1951 = vmatprep.subr.mxu0 0.0
    %1952 = vmatpush1.msra.mxu0 %v1225
    %1953 = vmatprep.subr.mxu0 0.0
    %1954 = vmatpush1.msra.mxu0 %v1226
    %1955 = vmatprep.subr.mxu0 0.0
    %1956 = vmatpush1.msra.mxu0 %v1227
    %1957 = vmatprep.subr.mxu0 0.0
    %1958 = vmatpush1.msra.mxu0 %v1228
    %1959 = vmatprep.subr.mxu0 0.0
    %1960 = vmatpush1.msra.mxu0 %v1229
    %1961 = vmatprep.subr.mxu0 0.0
    %1962 = vmatpush1.msra.mxu0 %v1230
    %1963 = vmatprep.mubr.f32.mxu0 %v1896
    %1964 = vmatmul.mubr.f32.gmra.mrb[0].mxu0 %v1895
    %v1965 = vpop.f32.mrb[0].mxu0
    %v1966 = vadd.f32 0.0, %v1965
    %v1967 = vpop.f32.mrb[0].mxu0
    %1968 = vdwg.mxu0
    %1969 = vmatprep.subr.mxu0 0.0
    %1970 = vmatpush1.msra.mxu0 %v1231
    %1971 = vmatprep.subr.mxu0 0.0
    %1972 = vmatpush1.msra.mxu0 %v1232
    %1973 = vmatprep.subr.mxu0 0.0
    %1974 = vmatpush1.msra.mxu0 %v1233
    %1975 = vmatprep.subr.mxu0 0.0
    %1976 = vmatpush1.msra.mxu0 %v1234
    %1977 = vmatprep.subr.mxu0 0.0
    %1978 = vmatpush1.msra.mxu0 %v1235
    %1979 = vmatprep.subr.mxu0 0.0
    %1980 = vmatpush1.msra.mxu0 %v1236
    %1981 = vmatprep.subr.mxu0 0.0
    %1982 = vmatpush1.msra.mxu0 %v1237
    %1983 = vmatprep.subr.mxu0 0.0
    %1984 = vmatpush1.msra.mxu0 %v1238
    %1985 = vmatprep.subr.mxu0 0.0
    %1986 = vmatpush1.msra.mxu0 %v1239
    %1987 = vmatprep.subr.mxu0 0.0
    %1988 = vmatpush1.msra.mxu0 %v1240
    %1989 = vmatprep.subr.mxu0 0.0
    %1990 = vmatpush1.msra.mxu0 %v1241
    %1991 = vmatprep.subr.mxu0 0.0
    %1992 = vmatpush1.msra.mxu0 %v1242
    %1993 = vmatprep.subr.mxu0 0.0
    %1994 = vmatpush1.msra.mxu0 %v1243
    %1995 = vmatprep.subr.mxu0 0.0
    %1996 = vmatpush1.msra.mxu0 %v1244
    %1997 = vmatprep.subr.mxu0 0.0
    %1998 = vmatpush1.msra.mxu0 %v1245
    %1999 = vmatprep.subr.mxu0 0.0
    %2000 = vmatpush1.msra.mxu0 %v1246
    %2001 = vmatprep.subr.mxu0 0.0
    %2002 = vmatpush1.msra.mxu0 %v1247
    %2003 = vmatprep.subr.mxu0 0.0
    %2004 = vmatpush1.msra.mxu0 %v1248
    %2005 = vmatprep.subr.mxu0 0.0
    %2006 = vmatpush1.msra.mxu0 %v1249
    %2007 = vmatprep.subr.mxu0 0.0
    %2008 = vmatpush1.msra.mxu0 %v1250
    %2009 = vmatprep.subr.mxu0 0.0
    %2010 = vmatpush1.msra.mxu0 %v1251
    %2011 = vmatprep.subr.mxu0 0.0
    %2012 = vmatpush1.msra.mxu0 %v1252
    %2013 = vmatprep.subr.mxu0 0.0
    %2014 = vmatpush1.msra.mxu0 %v1253
    %2015 = vmatprep.subr.mxu0 0.0
    %2016 = vmatpush1.msra.mxu0 %v1254
    %2017 = vmatprep.subr.mxu0 0.0
    %2018 = vmatpush1.msra.mxu0 %v1255
    %2019 = vmatprep.subr.mxu0 0.0
    %2020 = vmatpush1.msra.mxu0 %v1256
    %2021 = vmatprep.subr.mxu0 0.0
    %2022 = vmatpush1.msra.mxu0 %v1257
    %2023 = vmatprep.subr.mxu0 0.0
    %2024 = vmatpush1.msra.mxu0 %v1258
    %2025 = vmatprep.subr.mxu0 0.0
    %2026 = vmatpush1.msra.mxu0 %v1259
    %2027 = vmatprep.subr.mxu0 0.0
    %2028 = vmatpush1.msra.mxu0 %v1260
    %2029 = vmatprep.subr.mxu0 0.0
    %2030 = vmatpush1.msra.mxu0 %v1261
    %2031 = vmatprep.subr.mxu0 0.0
    %2032 = vmatpush1.msra.mxu0 %v1262
    %2033 = vmatprep.mubr.f32.mxu0 %v1898
    %2034 = vmatmul.mubr.f32.gmra.mrb[0].mxu0 %v1897
    %v2035 = vpop.f32.mrb[0].mxu0
    %v2036 = vadd.f32 %v1966, %v2035
    %v2037 = vpop.f32.mrb[0].mxu0
    %2038 = vdwg.mxu0
    %v2039 = vsel %vm1025, %v2036, 0.0
    %v2040 = vrot.slane %v2039, 4
    %v2041 = vadd.f32 %v2039, %v2040
    %v2042 = vrot.slane %v2041, 2
    %v2043 = vadd.f32 %v2041, %v2042
    %v2044 = vrot.slane %v2043, 1
    %v2045 = vadd.f32 %v2043, %v2044
    %v2046 = vmul.f32 %v2045, %v1054
    %v2047 = vmul.f32 %v2036, %v2036
    %v2048 = vsel %vm1025, %v2047, 0.0
    %v2049 = vrot.slane %v2048, 4
    %v2050 = vadd.f32 %v2048, %v2049
    %v2051 = vrot.slane %v2050, 2
    %v2052 = vadd.f32 %v2050, %v2051
    %v2053 = vrot.slane %v2052, 1
    %v2054 = vadd.f32 %v2052, %v2053
    %v2055 = vmul.f32 %v2054, %v1054
    %v2056 = vmul.f32 %v2046, %v2046
    %v2057 = vsub.f32 %v2055, %v2056
    %v2058 = vadd.f32 %v2057, 0.001
    %v2059 = vrsqrt.pop %v2058
    %v2060 = vmul.f32 %v1403, %v2059
    %v2061 = vsub.f32 %v2036, %v2046
    %v2063 = vlaneseq
    %v2064 = vshrl.u32 %v2063, 7
    %v2065 = vsub.s32 0, %v2064
    %v2066 = vrot.slane %v2060, %v2065
    %v2068 = vmul.f32 %v2061, %v2066
    %v2069 = vadd.f32 %v2068, %v1439
    %v2070 = vmax.f32 %v2069, 0.0
    %2071 = vst [vmem:[#allocation20] sm:$0x3] %v523
    %2072 = vst [vmem:[#allocation21] sm:$0x3] %v1442
    %2073 = vst [vmem:[#allocation23] sm:$0x3] %v2070
    %v2074 = vsub.f32 %v523, %v1442
    %v2075 = vadd.f32 %v2074, 1e-06
    %v2076 = vsub.f32 %v523, %v2070
    %v2077 = vadd.f32 %v2076, 1e-06
    %v2078 = vmul.f32 %v2075, %v2075
    %v2079 = vsel %vm1025, %v2078, 0.0
    %2080 = vadd.xlane.f32.xlu0 %v2079
    %v2081 = vpop.xlane.xlu0 %2080
    %v2082 = vrsqrt.pop %v2081
    %v2083 = vmul.f32 %v2081, %v2082
    %vm2084 = vcmp.eq.f32.partialorder %v2081, inf
    %v2085 = vsel %vm2084, %v2081, %v2083
    %vm2086 = vcmp.eq.f32.partialorder %v2081, 0.0
    %v2087 = vand.u32 %v2081, 2147483648
    %v2088 = vsel %vm2086, %v2087, %v2085
    %v2089 = vmul.f32 %v2077, %v2077
    %v2090 = vsel %vm1025, %v2089, 0.0
    %2091 = vadd.xlane.f32.xlu0 %v2090
    %v2092 = vpop.xlane.xlu0 %2091
    %v2093 = vrsqrt.pop %v2092
    %v2094 = vmul.f32 %v2092, %v2093
    %vm2095 = vcmp.eq.f32.partialorder %v2092, inf
    %v2096 = vsel %vm2095, %v2092, %v2094
    %vm2097 = vcmp.eq.f32.partialorder %v2092, 0.0
    %v2098 = vand.u32 %v2092, 2147483648
    %v2099 = vsel %vm2097, %v2098, %v2096
    %v2100 = vsub.f32 %v2099, %v2088
    %vm2101 = vcmp.gt.f32.partialorder %v2100, 1.0
    %v2102 = vsel %vm2101, 1, 0
    %v2103 = vsel %vm1025, %v2102, 0
    %v2104 = vrot.slane %v2103, 4
    %v2105 = vadd.s32 %v2103, %v2104
    %v2106 = vrot.slane %v2105, 2
    %v2107 = vadd.s32 %v2105, %v2106
    %v2108 = vrot.slane %v2107, 1
    %v2109 = vadd.s32 %v2107, %v2108
    %s2110 = vtos %v2109
    %v2111 = vstv %s2110
    %vm2112 = vcmask 0
    %2113 = vst.msk [vmem:[#allocation24] sm:$0x1] %vm2112, %v2111
    // Predicated region
    $region90: #{_lambda_.1} parent=1 // pred_check
      _
    $region91: #{_lambda_.1} parent=1 // pred_check_branch
      %2115 = sbr.rel (0) target = $region93
    $region92: #{_lambda_.1} parent=1 // pred_region
      %s2117 = ssub.s32 32, 32
      %2118 = vsyncadd [#allocation4], %s2117
      %s2120 = sshll.u32 [#allocation20], 4
      %s2121 = int_to_ptr.vmem [resolvable:$true] %s2120
      %2123 = dma.vmem_to_hbm [thread:$0]  %s2121, 32, %s11, [#allocation4]
    $region93: #{_lambda_.1} parent=1 // pred_fallthru
      _
    // Predicated region
    $region94: #{_lambda_.1} parent=1 // pred_check
      _
    $region95: #{_lambda_.1} parent=1 // pred_check_branch
      %2125 = sbr.rel (0) target = $region97
    $region96: #{_lambda_.1} parent=1 // pred_region
      %s2127 = ssub.s32 32, 32
      %2128 = vsyncadd [#allocation22], %s2127
      %s2130 = sshll.u32 [#allocation21], 4
      %s2131 = int_to_ptr.vmem [resolvable:$true] %s2130
      %2133 = dma.vmem_to_hbm [thread:$0]  %s2131, 32, %s12, [#allocation22]
    $region97: #{_lambda_.1} parent=1 // pred_fallthru
      _
    // Predicated region
    $region98: #{_lambda_.1} parent=1 // pred_check
      _
    $region99: #{_lambda_.1} parent=1 // pred_check_branch
      %2135 = sbr.rel (0) target = $region101
    $region100: #{_lambda_.1} parent=1 // pred_region
      %s2137 = ssub.s32 32, 32
      %2138 = vsyncadd [#allocation22], %s2137
      %s2140 = sshll.u32 [#allocation23], 4
      %s2141 = int_to_ptr.vmem [resolvable:$true] %s2140
      %2143 = dma.vmem_to_hbm [thread:$0]  %s2141, 32, %s13, [#allocation22]
    $region101: #{_lambda_.1} parent=1 // pred_fallthru
      _
    // Predicated region
    $region102: #{_lambda_.1} parent=1 // pred_check
      _
    $region103: #{_lambda_.1} parent=1 // pred_check_branch
      %2145 = sbr.rel (0) target = $region105
    $region104: #{_lambda_.1} parent=1 // pred_region
      %s2147 = ssub.s32 16, 16
      %2148 = vsyncadd [#allocation25], %s2147
      %s2150 = sshll.u32 [#allocation24], 4
      %s2151 = int_to_ptr.vmem [resolvable:$true] %s2150
      %2153 = dma.vmem_to_hbm [thread:$0]  %s2151, 16, %s14, [#allocation25]
    $region105: #{_lambda_.1} parent=1 // pred_fallthru
      _
    // Predicated region
    $region106: #{_lambda_.1} parent=1 // pred_check
      _
    $region107: #{_lambda_.1} parent=1 // pred_check_branch
      %2155 = sbr.rel (0) target = $region109
    $region108: #{_lambda_.1} parent=1 // pred_region
      %2156 = dma.done [#allocation4], 32
    $region109: #{_lambda_.1} parent=1 // pred_fallthru
      _
    // Predicated region
    $region110: #{_lambda_.1} parent=1 // pred_check
      _
    $region111: #{_lambda_.1} parent=1 // pred_check_branch
      %2158 = sbr.rel (0) target = $region113
    $region112: #{_lambda_.1} parent=1 // pred_region
      %2159 = dma.done [#allocation22], 32
    $region113: #{_lambda_.1} parent=1 // pred_fallthru
      _
    // Predicated region
    $region114: #{_lambda_.1} parent=1 // pred_check
      _
    $region115: #{_lambda_.1} parent=1 // pred_check_branch
      %2161 = sbr.rel (0) target = $region117
    $region116: #{_lambda_.1} parent=1 // pred_region
      %2162 = dma.done [#allocation22], 32
    $region117: #{_lambda_.1} parent=1 // pred_fallthru
      _
    // Predicated region
    $region118: #{_lambda_.1} parent=1 // pred_check
      _
    $region119: #{_lambda_.1} parent=1 // pred_check_branch
      %2164 = sbr.rel (0) target = $region121
    $region120: #{_lambda_.1} parent=1 // pred_region
      %2165 = dma.done [#allocation25], 16
    $region121: #{_lambda_.1} parent=1 // pred_fallthru
      _
    %2166 = vsyncpa [#allocation3], 1
    %2167 = vsyncpa [#allocation6], 1
    %2168 = vsyncpa [#allocation9], 1
    %2169 = vsyncpa [#allocation12], 1
    %2170 = vsyncpa [#allocation15], 1
    %2171 = vsyncpa [#allocation18], 1
    %2172 = vsyncpa [#allocation4], 1
    %2173 = vsyncpa [#allocation22], 1
    %2174 = vsyncpa [#allocation25], 1

</llo_original>
